<compile_context>
chip_gen: v5e
topology: v5e:2x2
jax: 0.10.0
libtpu: 0.0.40
codegen_flags: <defaults>
</compile_context>

<pallas_src>
import functools

import jax
import jax.numpy as jnp
from jax.experimental import pallas as pl
from jax.experimental.pallas import tpu as pltpu


# ----------------------------------------------------------------------------
# Kernels
# ----------------------------------------------------------------------------
def _highway_kernel_resident(x_lhs_ref, x_res_ref, w_ref, b_ref, o_ref, *, tn):
    """tk == size path: 2-D grid, no accumulator scratch, weights resident."""
    acc = jnp.dot(x_lhs_ref[...], w_ref[...], preferred_element_type=jnp.float32)
    acc = acc + b_ref[...].astype(jnp.float32)
    normal = jnp.maximum(acc[:, 0 * tn:1 * tn], 0.0)
    t_gate = jax.nn.sigmoid(acc[:, 1 * tn:2 * tn])
    c_gate = jax.nn.sigmoid(acc[:, 2 * tn:3 * tn])
    x_res = x_res_ref[...].astype(jnp.float32)
    y = x_res * c_gate + normal * t_gate * (1.0 - c_gate)
    o_ref[...] = y.astype(o_ref.dtype)


def _highway_kernel_ktiled(x_lhs_ref, x_res_ref, w_ref, b_ref, o_ref, acc_ref, *, tn):
    """(i, j, k) grid: single fused accumulator, bias folded into init."""
    k = pl.program_id(2)

    @pl.when(k == 0)
    def _init():
        acc_ref[...] = jnp.broadcast_to(b_ref[...].astype(jnp.float32), acc_ref.shape)

    acc_ref[...] += jnp.dot(x_lhs_ref[...], w_ref[...],
                            preferred_element_type=jnp.float32)

    @pl.when(k == pl.num_programs(2) - 1)
    def _finalize():
        acc = acc_ref[...]
        normal = jnp.maximum(acc[:, 0 * tn:1 * tn], 0.0)
        t_gate = jax.nn.sigmoid(acc[:, 1 * tn:2 * tn])
        c_gate = jax.nn.sigmoid(acc[:, 2 * tn:3 * tn])
        x_res = x_res_ref[...].astype(jnp.float32)
        y = x_res * c_gate + normal * t_gate * (1.0 - c_gate)
        o_ref[...] = y.astype(o_ref.dtype)


# ----------------------------------------------------------------------------
# Wrapper
# ----------------------------------------------------------------------------
def _pick_tile(dim, candidates):
    for c in candidates:
        if c <= dim and dim % c == 0:
            return c
    return dim


def _vmem_budget_bytes():
    """Generation-aware VMEM budget (physical capacity minus headroom)."""
    cap = None
    try:
        info = pltpu.get_tpu_info()
        cap = getattr(info, "vmem_capacity_bytes", None)
    except Exception:
        cap = None
    if not cap:
        cap = 64 << 20  # conservative: v7x physical VMEM
    return max(int(cap) - (16 << 20), 32 << 20)


def highway_layer(x, wn, bn, wt, bt, wc, bc, *,
                  tm=None, tn=None, tk=None, mxu_dtype=None):
    """x: (B, size). Weights (size, size) in (in, out) layout; biases (1, size)."""
    B, size = x.shape
    assert wn.shape == (size, size) and wt.shape == (size, size) and wc.shape == (size, size)
    assert bn.shape == (1, size) and bt.shape == (1, size) and bc.shape == (1, size)

    budget = _vmem_budget_bytes()

    # --- tile defaults: go as big as the problem allows -----------------------
    if tm is None:
        tm = _pick_tile(B, (1024, 512, 256, 128, 64, 32, 16, 8))
    if tn is None:
        tn = _pick_tile(size, (512, 256, 128))

    w_dtype = jnp.dtype(mxu_dtype) if mxu_dtype is not None else jnp.dtype(wn.dtype)
    wb = w_dtype.itemsize
    if tk is None:
        # Prefer tk == size (weights resident, no K axis / no accumulator) when
        # the fused (size, 3*tn) double-buffered strip fits a third of VMEM.
        if 2 * size * 3 * tn * wb <= budget // 3:
            tk = size
        else:
            tk = _pick_tile(size, (2048, 1024, 512, 256, 128))

    assert B % tm == 0 and size % tn == 0 and size % tk == 0, "tiles must divide shapes"
    assert tm % 8 == 0 or tm == B, "tm must be a multiple of 8 (sublane)"
    assert tn % 128 == 0 or tn == size, "tn must be a multiple of 128 (lane)"
    assert tk % 128 == 0 or tk == size, "tk must be a multiple of 128 (lane)"

    n_k = size // tk
    nb = size // tn

    # --- fuse weights/biases: per output tile j the fused columns are
    #     [Wn_j | Wt_j | Wc_j]  (one DMA + one matmul per step) ----------------
    def _fuse_cols(a, b, c):
        r = a.shape[0]
        stacked = jnp.stack([a.reshape(r, nb, tn),
                             b.reshape(r, nb, tn),
                             c.reshape(r, nb, tn)], axis=2)   # (r, nb, 3, tn)
        return stacked.reshape(r, 3 * size)

    w_fused = _fuse_cols(wn, wt, wc)
    b_fused = _fuse_cols(bn.astype(jnp.float32),
                         bt.astype(jnp.float32),
                         bc.astype(jnp.float32))

    # --- hoist MXU-dtype casts out of the kernel (halves DMA bytes for bf16) --
    if mxu_dtype is not None:
        x_lhs = x.astype(mxu_dtype)
        w_fused = w_fused.astype(mxu_dtype)
    else:
        x_lhs = x

    xb = jnp.dtype(x.dtype).itemsize
    lhs_b = jnp.dtype(x_lhs.dtype).itemsize
    ob = xb

    # --- VMEM request (double-buffered tiles + accumulator), capped per gen ---
    vmem_bytes = (
        2 * tm * tk * lhs_b           # x LHS tile
        + 2 * tm * tn * xb            # x residual tile
        + 2 * tk * 3 * tn * wb        # fused weight tile
        + 2 * 8 * 3 * tn * 4          # fused bias tile (sublane-padded)
        + 2 * tm * tn * ob            # output tile
        + (tm * 3 * tn * 4 if n_k > 1 else 0)   # fused accumulator
    )
    vmem_limit = min(int(vmem_bytes * 1.25) + (4 << 20), budget)

    cost = pl.CostEstimate(
        flops=2 * B * size * 3 * size,
        transcendentals=2 * B * size,                          # two sigmoids
        bytes_accessed=(x.size * lhs_b * (size // tn)          # x LHS re-reads
                        + x.size * xb                          # x residual
                        + w_fused.size * wb * (B // tm)        # weight re-reads
                        + b_fused.size * 4
                        + B * size * ob),
    )

    if n_k == 1:
        grid = (B // tm, size // tn)
        kernel = functools.partial(_highway_kernel_resident, tn=tn)
        in_specs = [
            pl.BlockSpec((tm, size), lambda i, j: (i, 0)),       # x (MXU LHS, full K)
            pl.BlockSpec((tm, tn), lambda i, j: (i, j)),         # x (residual)
            pl.BlockSpec((size, 3 * tn), lambda i, j: (0, j)),   # fused W strip
            pl.BlockSpec((1, 3 * tn), lambda i, j: (0, j)),      # fused bias
        ]
        out_specs = pl.BlockSpec((tm, tn), lambda i, j: (i, j))
        scratch_shapes = []
        dims = ("parallel", "parallel")
    else:
        grid = (B // tm, size // tn, n_k)
        kernel = functools.partial(_highway_kernel_ktiled, tn=tn)
        in_specs = [
            pl.BlockSpec((tm, tk), lambda i, j, k: (i, k)),          # x (MXU LHS)
            pl.BlockSpec((tm, tn), lambda i, j, k: (i, j)),          # x (residual)
            pl.BlockSpec((tk, 3 * tn), lambda i, j, k: (k, j)),      # fused W
            pl.BlockSpec((1, 3 * tn), lambda i, j, k: (0, j)),       # fused bias
        ]
        out_specs = pl.BlockSpec((tm, tn), lambda i, j, k: (i, j))
        scratch_shapes = [pltpu.VMEM((tm, 3 * tn), jnp.float32)]
        dims = ("parallel", "parallel", "arbitrary")

    return pl.pallas_call(
        kernel,
        out_shape=jax.ShapeDtypeStruct((B, size), x.dtype),
        grid_spec=pltpu.PrefetchScalarGridSpec(
            num_scalar_prefetch=0,
            grid=grid,
            in_specs=in_specs,
            out_specs=out_specs,
            scratch_shapes=scratch_shapes,
        ),
        compiler_params=pltpu.CompilerParams(
            dimension_semantics=dims,
            vmem_limit_bytes=vmem_limit,
        ),
        cost_estimate=cost,
    )(x_lhs, x, w_fused, b_fused)


def highway_ref(x, wn, bn, wt, bt, wc, bc, *, mxu_dtype=None):
    """Pure-JAX reference mirroring the PyTorch forward (optionally bf16 matmuls)."""
    if mxu_dtype is None:
        mm = lambda w: x @ w
    else:
        xc = x.astype(mxu_dtype)
        mm = lambda w: jnp.dot(xc, w.astype(mxu_dtype),
                               preferred_element_type=jnp.float32)
    normal = jax.nn.relu(mm(wn) + bn)
    t_gate = jax.nn.sigmoid(mm(wt) + bt)
    c_gate = jax.nn.sigmoid(mm(wc) + bc)
    return x * c_gate + normal * t_gate * (1.0 - c_gate)


if __name__ == "__main__":
    size = 256     # feature dim (multiple of 128 -> lane-dense tiles/stores)
    batch = 128

    key = jax.random.PRNGKey(0)
    kx, k1, k2, k3, k4, k5, k6 = jax.random.split(key, 7)

    # nn.Linear(size, size): weight (out, in); we store the transposed (in, out).
    bound = 1.0 / jnp.sqrt(size)
    x = jax.random.normal(kx, (batch, size), dtype=jnp.float32)
    wn = jax.random.uniform(k1, (size, size), jnp.float32, -bound, bound)
    bn = jax.random.uniform(k2, (1, size), jnp.float32, -bound, bound)
    wt = jax.random.uniform(k3, (size, size), jnp.float32, -bound, bound)
    bt = jax.random.uniform(k4, (1, size), jnp.float32, -bound, bound)
    wc = jax.random.uniform(k5, (size, size), jnp.float32, -bound, bound)
    bc = jax.random.uniform(k6, (1, size), jnp.float32, -bound, bound)

    ref = highway_ref(x, wn, bn, wt, bt, wc, bc)

    # --- 1) default tiles: tk == size -> resident-weight 2-D grid, f32 --------
    out = highway_layer(x, wn, bn, wt, bt, wc, bc)
    out = jax.block_until_ready(out)
    assert out.shape == (batch, size)
    assert jnp.allclose(out, ref, atol=1e-4, rtol=1e-4), "f32 (resident) mismatch"

    # --- 2) explicit small tiles: exercises the (i, j, k) accumulation path ---
    out_k = highway_layer(x, wn, bn, wt, bt, wc, bc, tm=64, tn=128, tk=128)
    out_k = jax.block_until_ready(out_k)
    assert jnp.allclose(out_k, ref, atol=1e-4, rtol=1e-4), "f32 (k-tiled) mismatch"

    # --- 3) bf16-MXU path (wrapper-side cast), f32 accumulation ---------------
    out_bf16 = highway_layer(x, wn, bn, wt, bt, wc, bc, mxu_dtype=jnp.bfloat16)
    out_bf16 = jax.block_until_ready(out_bf16)
    ref_bf16 = highway_ref(x, wn, bn, wt, bt, wc, bc, mxu_dtype=jnp.bfloat16)
    assert jnp.allclose(out_bf16, ref_bf16, atol=5e-3, rtol=5e-3), \
        "bf16 mismatch vs bf16 reference"

    # TODO(synk): optional fp8 weight path for v7x (not validated for accuracy here).
    print("KERNEL_OK")
</pallas_src>

<mosaic_0001>
module attributes {stable_mosaic.version = 11 : i64} {
  func.func @_highway_kernel_resident(%arg0: i32, %arg1: i32, %arg2: memref<128x256xf32, #tpu.memory_space<vmem>>, %arg3: memref<128x256xf32, #tpu.memory_space<vmem>>, %arg4: memref<256x768xf32, #tpu.memory_space<vmem>>, %arg5: memref<1x768xf32, #tpu.memory_space<vmem>>, %arg6: memref<128x256xf32, #tpu.memory_space<vmem>>) attributes {dimension_semantics = [#tpu.dimension_semantics<parallel>, #tpu.dimension_semantics<parallel>], iteration_bounds = array<i64: 1, 1>, scalar_prefetch = 0 : i64, scratch_operands = 0 : i64, tpu.core_type = #tpu.core_type<tc>, window_params = [{transform_indices = @transform_0, window_bounds = array<i64: 128, 256>}, {transform_indices = @transform_1, window_bounds = array<i64: 128, 256>}, {transform_indices = @transform_2, window_bounds = array<i64: 256, 768>}, {transform_indices = @transform_3, window_bounds = array<i64: 1, 768>}, {transform_indices = @transform_4, window_bounds = array<i64: 128, 256>}]} {
    %c0 = arith.constant 0 : index
    %c0_0 = arith.constant 0 : index
    %0 = vector.load %arg2[%c0, %c0_0] : memref<128x256xf32, #tpu.memory_space<vmem>>, vector<128x256xf32>
    %c0_1 = arith.constant 0 : index
    %c0_2 = arith.constant 0 : index
    %1 = vector.load %arg4[%c0_1, %c0_2] : memref<256x768xf32, #tpu.memory_space<vmem>>, vector<256x768xf32>
    %cst = arith.constant dense<0.000000e+00> : vector<128x768xf32>
    %2 = tpu.matmul %0, %1, %cst {dimension_numbers = #tpu.dot_dimension_numbers<[1], [0], [0], [1], [0, 0, 1, 1], [], []>} : vector<128x256xf32>, vector<256x768xf32>, vector<128x768xf32> -> vector<128x768xf32>
    %c0_3 = arith.constant 0 : index
    %c0_4 = arith.constant 0 : index
    %3 = vector.load %arg5[%c0_3, %c0_4] : memref<1x768xf32, #tpu.memory_space<vmem>>, vector<1x768xf32>
    %4 = vector.broadcast %3 : vector<1x768xf32> to vector<128x768xf32>
    %5 = arith.addf %2, %4 : vector<128x768xf32>
    %6 = vector.extract_strided_slice %5 {offsets = [0, 0], sizes = [128, 256], strides = [1, 1]} : vector<128x768xf32> to vector<128x256xf32>
    %cst_5 = arith.constant 0.000000e+00 : f32
    %7 = vector.broadcast %cst_5 : f32 to vector<128x256xf32>
    %8 = arith.maximumf %6, %7 : vector<128x256xf32>
    %9 = vector.extract_strided_slice %5 {offsets = [0, 256], sizes = [128, 256], strides = [1, 1]} : vector<128x768xf32> to vector<128x256xf32>
    %10 = arith.negf %9 : vector<128x256xf32>
    %11 = math.exp %10 : vector<128x256xf32>
    %cst_6 = arith.constant 1.000000e+00 : f32
    %12 = vector.broadcast %cst_6 : f32 to vector<128x256xf32>
    %13 = arith.addf %12, %11 : vector<128x256xf32>
    %14 = arith.divf %12, %13 : vector<128x256xf32>
    %15 = vector.extract_strided_slice %5 {offsets = [0, 512], sizes = [128, 256], strides = [1, 1]} : vector<128x768xf32> to vector<128x256xf32>
    %16 = arith.negf %15 : vector<128x256xf32>
    %17 = math.exp %16 : vector<128x256xf32>
    %cst_7 = arith.constant 1.000000e+00 : f32
    %18 = vector.broadcast %cst_7 : f32 to vector<128x256xf32>
    %19 = arith.addf %18, %17 : vector<128x256xf32>
    %20 = arith.divf %18, %19 : vector<128x256xf32>
    %c0_8 = arith.constant 0 : index
    %c0_9 = arith.constant 0 : index
    %21 = vector.load %arg3[%c0_8, %c0_9] : memref<128x256xf32, #tpu.memory_space<vmem>>, vector<128x256xf32>
    %22 = arith.mulf %21, %20 : vector<128x256xf32>
    %23 = arith.mulf %8, %14 : vector<128x256xf32>
    %cst_10 = arith.constant 1.000000e+00 : f32
    %24 = vector.broadcast %cst_10 : f32 to vector<128x256xf32>
    %25 = arith.subf %24, %20 : vector<128x256xf32>
    %26 = arith.mulf %23, %25 : vector<128x256xf32>
    %27 = arith.addf %22, %26 : vector<128x256xf32>
    %c0_11 = arith.constant 0 : index
    %c0_12 = arith.constant 0 : index
    %28 = vector.load %arg6[%c0_11, %c0_12] : memref<128x256xf32, #tpu.memory_space<vmem>>, vector<128x256xf32>
    tpu.vector_store %arg6[%c0_11, %c0_12], %27 {strides = array<i32>} : memref<128x256xf32, #tpu.memory_space<vmem>>, vector<128x256xf32>,
    return
  }
  func.func @transform_0(%arg0: i32, %arg1: i32) -> (i32, i32) {
    %c0_i32 = arith.constant 0 : i32
    %c0_i32_0 = arith.constant 0 : i32
    return %arg0, %c0_i32 : i32, i32
  }
  func.func @transform_1(%arg0: i32, %arg1: i32) -> (i32, i32) {
    %c0_i32 = arith.constant 0 : i32
    return %arg0, %arg1 : i32, i32
  }
  func.func @transform_2(%arg0: i32, %arg1: i32) -> (i32, i32) {
    %c0_i32 = arith.constant 0 : i32
    %c0_i32_0 = arith.constant 0 : i32
    return %c0_i32, %arg1 : i32, i32
  }
  func.func @transform_3(%arg0: i32, %arg1: i32) -> (i32, i32) {
    %c0_i32 = arith.constant 0 : i32
    %c0_i32_0 = arith.constant 0 : i32
    return %c0_i32, %arg1 : i32, i32
  }
  func.func @transform_4(%arg0: i32, %arg1: i32) -> (i32, i32) {
    %c0_i32 = arith.constant 0 : i32
    return %arg0, %arg1 : i32, i32
  }
}

</mosaic_0001>

<llo_original>
// kernel: tpu_custom_call.1
$region0: #{tpu_custom_call.1}
  #allocation0 [shape = 'u32[]', space=smem, size = 0x4, offset = 0x4, fixed_abs, tag = 'smem constant byte address 0x4 - core index']
  #allocation1 [shape = 'u32[72,128]{1,0:T(1,128)}', space=vmem, size = 0x9000, scoped, tag = 'internal scratch']
  %s0 = inlined_call_operand.hbm [shape: f32[128,256], index: 0, kind: input, shape index: {}]
  %s1 = inlined_call_operand.hbm [shape: f32[128,256], index: 1, kind: input, shape index: {}]
  %s2 = inlined_call_operand.hbm [shape: f32[256,768], index: 2, kind: input, shape index: {}]
  %s3 = inlined_call_operand.hbm [shape: f32[1,768], index: 3, kind: input, shape index: {}]
  %s4 = inlined_call_operand.hbm [shape: f32[128,256], index: 4, kind: output, shape index: {}]
  %s5 = sld [smem:[#allocation0]]
  $region42: #{tpu_custom_call.1} parent=0
    _
  %s7 = ssub.s32 1, %s5
  %s8 = scalar_select 0, %s7, %s5
  $region1: #{tpu_custom_call.1} parent=0
    #allocation2 [shape = 'u8[131072]{0}', space=vmem, size = 0x20000, scoped, tag = 'input window, operand 0, single buffered']
    #allocation3 [shape = 's32[1]{0}', space=sflag, size = 0x4, scoped, tag = 'scoped memory for tpu_custom_call.1']
    #allocation4 [shape = 's32[1]{0}', space=sflag, size = 0x4, scoped, tag = 'scoped memory for tpu_custom_call.1']
    #allocation5 [shape = 'u8[131072]{0}', space=vmem, size = 0x20000, scoped, tag = 'input window, operand 1, single buffered']
    #allocation6 [shape = 's32[1]{0}', space=sflag, size = 0x4, scoped, tag = 'scoped memory for tpu_custom_call.1']
    #allocation7 [shape = 'u8[786432]{0}', space=vmem, size = 0xc0000, scoped, tag = 'input window, operand 2, single buffered']
    #allocation8 [shape = 'u8[3072]{0}', space=vmem, size = 0xc00, scoped, tag = 'input window, operand 3, single buffered']
    #allocation9 [shape = 's32[1]{0}', space=sflag, size = 0x4, scoped, tag = 'scoped memory for tpu_custom_call.1']
    #allocation10 [shape = 'u8[131072]{0}', space=vmem, size = 0x20000, scoped, tag = 'output window, operand 0, single buffered']
    %9 = vsyncpa [#allocation3], 0
    %10 = vsyncpa [#allocation6], 0
    %11 = vsyncpa [#allocation9], 0
    %12 = vsyncpa [#allocation4], 0
    // Predicated region
    $region2: #{tpu_custom_call.1} parent=1 // pred_check
      _
    $region3: #{tpu_custom_call.1} parent=1 // pred_check_branch
      %14 = sbr.rel (0) target = $region5
    $region4: #{tpu_custom_call.1} parent=1 // pred_region
      %16 = vsyncadd [#allocation3], 0
      %s17 = sshll.u32 %s0, 4
      %s18 = int_to_ptr.hbm [resolvable:$true] %s17
      %s19 = sshll.u32 [#allocation2], 4
      %s20 = int_to_ptr.vmem [resolvable:$true] %s19
      %25 = dma.hbm_to_vmem [thread:$0]  %s18, 4096, %s20, [#allocation3], 256, 256, 16
    $region5: #{tpu_custom_call.1} parent=1 // pred_fallthru
      _
    // Predicated region
    $region6: #{tpu_custom_call.1} parent=1 // pred_check
      _
    $region7: #{tpu_custom_call.1} parent=1 // pred_check_branch
      %27 = sbr.rel (0) target = $region9
    $region8: #{tpu_custom_call.1} parent=1 // pred_region
      %29 = vsyncadd [#allocation6], 0
      %s30 = sshll.u32 %s1, 4
      %s31 = int_to_ptr.hbm [resolvable:$true] %s30
      %s32 = sshll.u32 [#allocation5], 4
      %s33 = int_to_ptr.vmem [resolvable:$true] %s32
      %38 = dma.hbm_to_vmem [thread:$0]  %s31, 4096, %s33, [#allocation6], 256, 256, 16
    $region9: #{tpu_custom_call.1} parent=1 // pred_fallthru
      _
    // Predicated region
    $region10: #{tpu_custom_call.1} parent=1 // pred_check
      _
    $region11: #{tpu_custom_call.1} parent=1 // pred_check_branch
      %40 = sbr.rel (0) target = $region13
    $region12: #{tpu_custom_call.1} parent=1 // pred_region
      %42 = vsyncadd [#allocation6], 0
      %s43 = sshll.u32 %s2, 4
      %s44 = int_to_ptr.hbm [resolvable:$true] %s43
      %s45 = sshll.u32 [#allocation7], 4
      %s46 = int_to_ptr.vmem [resolvable:$true] %s45
      %51 = dma.hbm_to_vmem [thread:$0]  %s44, 24576, %s46, [#allocation6], 768, 768, 48
    $region13: #{tpu_custom_call.1} parent=1 // pred_fallthru
      _
    // Predicated region
    $region14: #{tpu_custom_call.1} parent=1 // pred_check
      _
    $region15: #{tpu_custom_call.1} parent=1 // pred_check_branch
      %53 = sbr.rel (0) target = $region17
    $region16: #{tpu_custom_call.1} parent=1 // pred_region
      %55 = vsyncadd [#allocation9], 0
      %s57 = sshll.u32 %s3, 4
      %s58 = int_to_ptr.hbm [resolvable:$true] %s57
      %s59 = sshll.u32 [#allocation8], 4
      %s60 = int_to_ptr.vmem [resolvable:$true] %s59
      %62 = dma.hbm_to_vmem [thread:$0]  %s58, 96, %s60, [#allocation9]
    $region17: #{tpu_custom_call.1} parent=1 // pred_fallthru
      _
    // Predicated region
    $region18: #{tpu_custom_call.1} parent=1 // pred_check
      _
    $region19: #{tpu_custom_call.1} parent=1 // pred_check_branch
      %64 = sbr.rel (0) target = $region21
    $region20: #{tpu_custom_call.1} parent=1 // pred_region
      %66 = dma.done [#allocation3], 4096
    $region21: #{tpu_custom_call.1} parent=1 // pred_fallthru
      _
    // Predicated region
    $region22: #{tpu_custom_call.1} parent=1 // pred_check
      _
    $region23: #{tpu_custom_call.1} parent=1 // pred_check_branch
      %68 = sbr.rel (0) target = $region25
    $region24: #{tpu_custom_call.1} parent=1 // pred_region
      %70 = dma.done [#allocation6], 4096
    $region25: #{tpu_custom_call.1} parent=1 // pred_fallthru
      _
    // Predicated region
    $region26: #{tpu_custom_call.1} parent=1 // pred_check
      _
    $region27: #{tpu_custom_call.1} parent=1 // pred_check_branch
      %72 = sbr.rel (0) target = $region29
    $region28: #{tpu_custom_call.1} parent=1 // pred_region
      %74 = dma.done [#allocation6], 24576
    $region29: #{tpu_custom_call.1} parent=1 // pred_fallthru
      _
    // Predicated region
    $region30: #{tpu_custom_call.1} parent=1 // pred_check
      _
    $region31: #{tpu_custom_call.1} parent=1 // pred_check_branch
      %76 = sbr.rel (0) target = $region33
    $region32: #{tpu_custom_call.1} parent=1 // pred_region
      %78 = dma.done [#allocation9], 96
    $region33: #{tpu_custom_call.1} parent=1 // pred_fallthru
      _
    %v79 = vld [vmem:[#allocation2] sm:$0xff]
    %v80 = vld [vmem:[#allocation2 + $0x8] sm:$0xff]
    %v81 = vld [vmem:[#allocation2 + $0x10] sm:$0xff]
    %v82 = vld [vmem:[#allocation2 + $0x18] sm:$0xff]
    %v83 = vld [vmem:[#allocation2 + $0x20] sm:$0xff]
    %v84 = vld [vmem:[#allocation2 + $0x28] sm:$0xff]
    %v85 = vld [vmem:[#allocation2 + $0x30] sm:$0xff]
    %v86 = vld [vmem:[#allocation2 + $0x38] sm:$0xff]
    %v87 = vld [vmem:[#allocation2 + $0x40] sm:$0xff]
    %v88 = vld [vmem:[#allocation2 + $0x48] sm:$0xff]
    %v89 = vld [vmem:[#allocation2 + $0x50] sm:$0xff]
    %v90 = vld [vmem:[#allocation2 + $0x58] sm:$0xff]
    %v91 = vld [vmem:[#allocation2 + $0x60] sm:$0xff]
    %v92 = vld [vmem:[#allocation2 + $0x68] sm:$0xff]
    %v93 = vld [vmem:[#allocation2 + $0x70] sm:$0xff]
    %v94 = vld [vmem:[#allocation2 + $0x78] sm:$0xff]
    %v95 = vld [vmem:[#allocation2 + $0x80] sm:$0xff]
    %v96 = vld [vmem:[#allocation2 + $0x88] sm:$0xff]
    %v97 = vld [vmem:[#allocation2 + $0x90] sm:$0xff]
    %v98 = vld [vmem:[#allocation2 + $0x98] sm:$0xff]
    %v99 = vld [vmem:[#allocation2 + $0xa0] sm:$0xff]
    %v100 = vld [vmem:[#allocation2 + $0xa8] sm:$0xff]
    %v101 = vld [vmem:[#allocation2 + $0xb0] sm:$0xff]
    %v102 = vld [vmem:[#allocation2 + $0xb8] sm:$0xff]
    %v103 = vld [vmem:[#allocation2 + $0xc0] sm:$0xff]
    %v104 = vld [vmem:[#allocation2 + $0xc8] sm:$0xff]
    %v105 = vld [vmem:[#allocation2 + $0xd0] sm:$0xff]
    %v106 = vld [vmem:[#allocation2 + $0xd8] sm:$0xff]
    %v107 = vld [vmem:[#allocation2 + $0xe0] sm:$0xff]
    %v108 = vld [vmem:[#allocation2 + $0xe8] sm:$0xff]
    %v109 = vld [vmem:[#allocation2 + $0xf0] sm:$0xff]
    %v110 = vld [vmem:[#allocation2 + $0xf8] sm:$0xff]
    %v111 = vld [vmem:[#allocation7] sm:$0xff]
    %v112 = vld [vmem:[#allocation7 + $0x8] sm:$0xff]
    %v113 = vld [vmem:[#allocation7 + $0x10] sm:$0xff]
    %v114 = vld [vmem:[#allocation7 + $0x18] sm:$0xff]
    %v115 = vld [vmem:[#allocation7 + $0x20] sm:$0xff]
    %v116 = vld [vmem:[#allocation7 + $0x28] sm:$0xff]
    %v117 = vld [vmem:[#allocation7 + $0x30] sm:$0xff]
    %v118 = vld [vmem:[#allocation7 + $0x38] sm:$0xff]
    %v119 = vld [vmem:[#allocation7 + $0x40] sm:$0xff]
    %v120 = vld [vmem:[#allocation7 + $0x48] sm:$0xff]
    %v121 = vld [vmem:[#allocation7 + $0x50] sm:$0xff]
    %v122 = vld [vmem:[#allocation7 + $0x58] sm:$0xff]
    %v123 = vld [vmem:[#allocation7 + $0x60] sm:$0xff]
    %v124 = vld [vmem:[#allocation7 + $0x68] sm:$0xff]
    %v125 = vld [vmem:[#allocation7 + $0x70] sm:$0xff]
    %v126 = vld [vmem:[#allocation7 + $0x78] sm:$0xff]
    %v127 = vld [vmem:[#allocation7 + $0x80] sm:$0xff]
    %v128 = vld [vmem:[#allocation7 + $0x88] sm:$0xff]
    %v129 = vld [vmem:[#allocation7 + $0x90] sm:$0xff]
    %v130 = vld [vmem:[#allocation7 + $0x98] sm:$0xff]
    %v131 = vld [vmem:[#allocation7 + $0xa0] sm:$0xff]
    %v132 = vld [vmem:[#allocation7 + $0xa8] sm:$0xff]
    %v133 = vld [vmem:[#allocation7 + $0xb0] sm:$0xff]
    %v134 = vld [vmem:[#allocation7 + $0xb8] sm:$0xff]
    %v135 = vld [vmem:[#allocation7 + $0xc0] sm:$0xff]
    %v136 = vld [vmem:[#allocation7 + $0xc8] sm:$0xff]
    %v137 = vld [vmem:[#allocation7 + $0xd0] sm:$0xff]
    %v138 = vld [vmem:[#allocation7 + $0xd8] sm:$0xff]
    %v139 = vld [vmem:[#allocation7 + $0xe0] sm:$0xff]
    %v140 = vld [vmem:[#allocation7 + $0xe8] sm:$0xff]
    %v141 = vld [vmem:[#allocation7 + $0xf0] sm:$0xff]
    %v142 = vld [vmem:[#allocation7 + $0xf8] sm:$0xff]
    %v143 = vld [vmem:[#allocation7 + $0x100] sm:$0xff]
    %v144 = vld [vmem:[#allocation7 + $0x108] sm:$0xff]
    %v145 = vld [vmem:[#allocation7 + $0x110] sm:$0xff]
    %v146 = vld [vmem:[#allocation7 + $0x118] sm:$0xff]
    %v147 = vld [vmem:[#allocation7 + $0x120] sm:$0xff]
    %v148 = vld [vmem:[#allocation7 + $0x128] sm:$0xff]
    %v149 = vld [vmem:[#allocation7 + $0x130] sm:$0xff]
    %v150 = vld [vmem:[#allocation7 + $0x138] sm:$0xff]
    %v151 = vld [vmem:[#allocation7 + $0x140] sm:$0xff]
    %v152 = vld [vmem:[#allocation7 + $0x148] sm:$0xff]
    %v153 = vld [vmem:[#allocation7 + $0x150] sm:$0xff]
    %v154 = vld [vmem:[#allocation7 + $0x158] sm:$0xff]
    %v155 = vld [vmem:[#allocation7 + $0x160] sm:$0xff]
    %v156 = vld [vmem:[#allocation7 + $0x168] sm:$0xff]
    %v157 = vld [vmem:[#allocation7 + $0x170] sm:$0xff]
    %v158 = vld [vmem:[#allocation7 + $0x178] sm:$0xff]
    %v159 = vld [vmem:[#allocation7 + $0x180] sm:$0xff]
    %v160 = vld [vmem:[#allocation7 + $0x188] sm:$0xff]
    %v161 = vld [vmem:[#allocation7 + $0x190] sm:$0xff]
    %v162 = vld [vmem:[#allocation7 + $0x198] sm:$0xff]
    %v163 = vld [vmem:[#allocation7 + $0x1a0] sm:$0xff]
    %v164 = vld [vmem:[#allocation7 + $0x1a8] sm:$0xff]
    %v165 = vld [vmem:[#allocation7 + $0x1b0] sm:$0xff]
    %v166 = vld [vmem:[#allocation7 + $0x1b8] sm:$0xff]
    %v167 = vld [vmem:[#allocation7 + $0x1c0] sm:$0xff]
    %v168 = vld [vmem:[#allocation7 + $0x1c8] sm:$0xff]
    %v169 = vld [vmem:[#allocation7 + $0x1d0] sm:$0xff]
    %v170 = vld [vmem:[#allocation7 + $0x1d8] sm:$0xff]
    %v171 = vld [vmem:[#allocation7 + $0x1e0] sm:$0xff]
    %v172 = vld [vmem:[#allocation7 + $0x1e8] sm:$0xff]
    %v173 = vld [vmem:[#allocation7 + $0x1f0] sm:$0xff]
    %v174 = vld [vmem:[#allocation7 + $0x1f8] sm:$0xff]
    %v175 = vld [vmem:[#allocation7 + $0x200] sm:$0xff]
    %v176 = vld [vmem:[#allocation7 + $0x208] sm:$0xff]
    %v177 = vld [vmem:[#allocation7 + $0x210] sm:$0xff]
    %v178 = vld [vmem:[#allocation7 + $0x218] sm:$0xff]
    %v179 = vld [vmem:[#allocation7 + $0x220] sm:$0xff]
    %v180 = vld [vmem:[#allocation7 + $0x228] sm:$0xff]
    %v181 = vld [vmem:[#allocation7 + $0x230] sm:$0xff]
    %v182 = vld [vmem:[#allocation7 + $0x238] sm:$0xff]
    %v183 = vld [vmem:[#allocation7 + $0x240] sm:$0xff]
    %v184 = vld [vmem:[#allocation7 + $0x248] sm:$0xff]
    %v185 = vld [vmem:[#allocation7 + $0x250] sm:$0xff]
    %v186 = vld [vmem:[#allocation7 + $0x258] sm:$0xff]
    %v187 = vld [vmem:[#allocation7 + $0x260] sm:$0xff]
    %v188 = vld [vmem:[#allocation7 + $0x268] sm:$0xff]
    %v189 = vld [vmem:[#allocation7 + $0x270] sm:$0xff]
    %v190 = vld [vmem:[#allocation7 + $0x278] sm:$0xff]
    %v191 = vld [vmem:[#allocation7 + $0x280] sm:$0xff]
    %v192 = vld [vmem:[#allocation7 + $0x288] sm:$0xff]
    %v193 = vld [vmem:[#allocation7 + $0x290] sm:$0xff]
    %v194 = vld [vmem:[#allocation7 + $0x298] sm:$0xff]
    %v195 = vld [vmem:[#allocation7 + $0x2a0] sm:$0xff]
    %v196 = vld [vmem:[#allocation7 + $0x2a8] sm:$0xff]
    %v197 = vld [vmem:[#allocation7 + $0x2b0] sm:$0xff]
    %v198 = vld [vmem:[#allocation7 + $0x2b8] sm:$0xff]
    %v199 = vld [vmem:[#allocation7 + $0x2c0] sm:$0xff]
    %v200 = vld [vmem:[#allocation7 + $0x2c8] sm:$0xff]
    %v201 = vld [vmem:[#allocation7 + $0x2d0] sm:$0xff]
    %v202 = vld [vmem:[#allocation7 + $0x2d8] sm:$0xff]
    %v203 = vld [vmem:[#allocation7 + $0x2e0] sm:$0xff]
    %v204 = vld [vmem:[#allocation7 + $0x2e8] sm:$0xff]
    %v205 = vld [vmem:[#allocation7 + $0x2f0] sm:$0xff]
    %v206 = vld [vmem:[#allocation7 + $0x2f8] sm:$0xff]
    %v207 = vld [vmem:[#allocation7 + $0x300] sm:$0xff]
    %v208 = vld [vmem:[#allocation7 + $0x308] sm:$0xff]
    %v209 = vld [vmem:[#allocation7 + $0x310] sm:$0xff]
    %v210 = vld [vmem:[#allocation7 + $0x318] sm:$0xff]
    %v211 = vld [vmem:[#allocation7 + $0x320] sm:$0xff]
    %v212 = vld [vmem:[#allocation7 + $0x328] sm:$0xff]
    %v213 = vld [vmem:[#allocation7 + $0x330] sm:$0xff]
    %v214 = vld [vmem:[#allocation7 + $0x338] sm:$0xff]
    %v215 = vld [vmem:[#allocation7 + $0x340] sm:$0xff]
    %v216 = vld [vmem:[#allocation7 + $0x348] sm:$0xff]
    %v217 = vld [vmem:[#allocation7 + $0x350] sm:$0xff]
    %v218 = vld [vmem:[#allocation7 + $0x358] sm:$0xff]
    %v219 = vld [vmem:[#allocation7 + $0x360] sm:$0xff]
    %v220 = vld [vmem:[#allocation7 + $0x368] sm:$0xff]
    %v221 = vld [vmem:[#allocation7 + $0x370] sm:$0xff]
    %v222 = vld [vmem:[#allocation7 + $0x378] sm:$0xff]
    %v223 = vld [vmem:[#allocation7 + $0x380] sm:$0xff]
    %v224 = vld [vmem:[#allocation7 + $0x388] sm:$0xff]
    %v225 = vld [vmem:[#allocation7 + $0x390] sm:$0xff]
    %v226 = vld [vmem:[#allocation7 + $0x398] sm:$0xff]
    %v227 = vld [vmem:[#allocation7 + $0x3a0] sm:$0xff]
    %v228 = vld [vmem:[#allocation7 + $0x3a8] sm:$0xff]
    %v229 = vld [vmem:[#allocation7 + $0x3b0] sm:$0xff]
    %v230 = vld [vmem:[#allocation7 + $0x3b8] sm:$0xff]
    %v231 = vld [vmem:[#allocation7 + $0x3c0] sm:$0xff]
    %v232 = vld [vmem:[#allocation7 + $0x3c8] sm:$0xff]
    %v233 = vld [vmem:[#allocation7 + $0x3d0] sm:$0xff]
    %v234 = vld [vmem:[#allocation7 + $0x3d8] sm:$0xff]
    %v235 = vld [vmem:[#allocation7 + $0x3e0] sm:$0xff]
    %v236 = vld [vmem:[#allocation7 + $0x3e8] sm:$0xff]
    %v237 = vld [vmem:[#allocation7 + $0x3f0] sm:$0xff]
    %v238 = vld [vmem:[#allocation7 + $0x3f8] sm:$0xff]
    %v239 = vld [vmem:[#allocation7 + $0x400] sm:$0xff]
    %v240 = vld [vmem:[#allocation7 + $0x408] sm:$0xff]
    %v241 = vld [vmem:[#allocation7 + $0x410] sm:$0xff]
    %v242 = vld [vmem:[#allocation7 + $0x418] sm:$0xff]
    %v243 = vld [vmem:[#allocation7 + $0x420] sm:$0xff]
    %v244 = vld [vmem:[#allocation7 + $0x428] sm:$0xff]
    %v245 = vld [vmem:[#allocation7 + $0x430] sm:$0xff]
    %v246 = vld [vmem:[#allocation7 + $0x438] sm:$0xff]
    %v247 = vld [vmem:[#allocation7 + $0x440] sm:$0xff]
    %v248 = vld [vmem:[#allocation7 + $0x448] sm:$0xff]
    %v249 = vld [vmem:[#allocation7 + $0x450] sm:$0xff]
    %v250 = vld [vmem:[#allocation7 + $0x458] sm:$0xff]
    %v251 = vld [vmem:[#allocation7 + $0x460] sm:$0xff]
    %v252 = vld [vmem:[#allocation7 + $0x468] sm:$0xff]
    %v253 = vld [vmem:[#allocation7 + $0x470] sm:$0xff]
    %v254 = vld [vmem:[#allocation7 + $0x478] sm:$0xff]
    %v255 = vld [vmem:[#allocation7 + $0x480] sm:$0xff]
    %v256 = vld [vmem:[#allocation7 + $0x488] sm:$0xff]
    %v257 = vld [vmem:[#allocation7 + $0x490] sm:$0xff]
    %v258 = vld [vmem:[#allocation7 + $0x498] sm:$0xff]
    %v259 = vld [vmem:[#allocation7 + $0x4a0] sm:$0xff]
    %v260 = vld [vmem:[#allocation7 + $0x4a8] sm:$0xff]
    %v261 = vld [vmem:[#allocation7 + $0x4b0] sm:$0xff]
    %v262 = vld [vmem:[#allocation7 + $0x4b8] sm:$0xff]
    %v263 = vld [vmem:[#allocation7 + $0x4c0] sm:$0xff]
    %v264 = vld [vmem:[#allocation7 + $0x4c8] sm:$0xff]
    %v265 = vld [vmem:[#allocation7 + $0x4d0] sm:$0xff]
    %v266 = vld [vmem:[#allocation7 + $0x4d8] sm:$0xff]
    %v267 = vld [vmem:[#allocation7 + $0x4e0] sm:$0xff]
    %v268 = vld [vmem:[#allocation7 + $0x4e8] sm:$0xff]
    %v269 = vld [vmem:[#allocation7 + $0x4f0] sm:$0xff]
    %v270 = vld [vmem:[#allocation7 + $0x4f8] sm:$0xff]
    %v271 = vld [vmem:[#allocation7 + $0x500] sm:$0xff]
    %v272 = vld [vmem:[#allocation7 + $0x508] sm:$0xff]
    %v273 = vld [vmem:[#allocation7 + $0x510] sm:$0xff]
    %v274 = vld [vmem:[#allocation7 + $0x518] sm:$0xff]
    %v275 = vld [vmem:[#allocation7 + $0x520] sm:$0xff]
    %v276 = vld [vmem:[#allocation7 + $0x528] sm:$0xff]
    %v277 = vld [vmem:[#allocation7 + $0x530] sm:$0xff]
    %v278 = vld [vmem:[#allocation7 + $0x538] sm:$0xff]
    %v279 = vld [vmem:[#allocation7 + $0x540] sm:$0xff]
    %v280 = vld [vmem:[#allocation7 + $0x548] sm:$0xff]
    %v281 = vld [vmem:[#allocation7 + $0x550] sm:$0xff]
    %v282 = vld [vmem:[#allocation7 + $0x558] sm:$0xff]
    %v283 = vld [vmem:[#allocation7 + $0x560] sm:$0xff]
    %v284 = vld [vmem:[#allocation7 + $0x568] sm:$0xff]
    %v285 = vld [vmem:[#allocation7 + $0x570] sm:$0xff]
    %v286 = vld [vmem:[#allocation7 + $0x578] sm:$0xff]
    %v287 = vld [vmem:[#allocation7 + $0x580] sm:$0xff]
    %v288 = vld [vmem:[#allocation7 + $0x588] sm:$0xff]
    %v289 = vld [vmem:[#allocation7 + $0x590] sm:$0xff]
    %v290 = vld [vmem:[#allocation7 + $0x598] sm:$0xff]
    %v291 = vld [vmem:[#allocation7 + $0x5a0] sm:$0xff]
    %v292 = vld [vmem:[#allocation7 + $0x5a8] sm:$0xff]
    %v293 = vld [vmem:[#allocation7 + $0x5b0] sm:$0xff]
    %v294 = vld [vmem:[#allocation7 + $0x5b8] sm:$0xff]
    %v295 = vld [vmem:[#allocation7 + $0x5c0] sm:$0xff]
    %v296 = vld [vmem:[#allocation7 + $0x5c8] sm:$0xff]
    %v297 = vld [vmem:[#allocation7 + $0x5d0] sm:$0xff]
    %v298 = vld [vmem:[#allocation7 + $0x5d8] sm:$0xff]
    %v299 = vld [vmem:[#allocation7 + $0x5e0] sm:$0xff]
    %v300 = vld [vmem:[#allocation7 + $0x5e8] sm:$0xff]
    %v301 = vld [vmem:[#allocation7 + $0x5f0] sm:$0xff]
    %v302 = vld [vmem:[#allocation7 + $0x5f8] sm:$0xff]
    %v303 = vld [vmem:[#allocation8] sm:$0x3f]
    %v305 = vperm.slane %v303, 0
    %v306 = vperm.slane %v303, 1
    %v307 = vperm.slane %v303, 2
    %v308 = vperm.slane %v303, 3
    %v309 = vperm.slane %v303, 4
    %v310 = vperm.slane %v303, 5
    %317 = vmatpush.msra.mxu0 %v201
    %318 = vmatpush.msra.mxu0 %v195
    %319 = vmatpush.msra.mxu0 %v189
    %320 = vmatpush.msra.mxu0 %v183
    %321 = vmatpush.msra.mxu0 %v177
    %322 = vmatpush.msra.mxu0 %v171
    %323 = vmatpush.msra.mxu0 %v165
    %324 = vmatpush.msra.mxu0 %v159
    %325 = vmatpush.msra.mxu0 %v153
    %326 = vmatpush.msra.mxu0 %v147
    %327 = vmatpush.msra.mxu0 %v141
    %328 = vmatpush.msra.mxu0 %v135
    %329 = vmatpush.msra.mxu0 %v129
    %330 = vmatpush.msra.mxu0 %v123
    %331 = vmatpush.msra.mxu0 %v117
    %332 = vmatpush.msra.mxu0 %v111
    %333 = vmatmul.f32.gmra.mxu0 %v79
    %v334 = vpop.f32.mrf.mxu0
    %v335 = vadd.f32 %v305, %v334
    %336 = vmatmul.f32.gmra.mxu0 %v81
    %v337 = vpop.f32.mrf.mxu0
    %v338 = vadd.f32 %v305, %v337
    %339 = vmatmul.f32.gmra.mxu0 %v83
    %v340 = vpop.f32.mrf.mxu0
    %v341 = vadd.f32 %v305, %v340
    %342 = vmatmul.f32.gmra.mxu0 %v85
    %v343 = vpop.f32.mrf.mxu0
    %v344 = vadd.f32 %v305, %v343
    %345 = vmatmul.f32.gmra.mxu0 %v87
    %v346 = vpop.f32.mrf.mxu0
    %v347 = vadd.f32 %v305, %v346
    %348 = vmatmul.f32.gmra.mxu0 %v89
    %v349 = vpop.f32.mrf.mxu0
    %v350 = vadd.f32 %v305, %v349
    %351 = vmatmul.f32.gmra.mxu0 %v91
    %v352 = vpop.f32.mrf.mxu0
    %v353 = vadd.f32 %v305, %v352
    %354 = vmatmul.f32.gmra.mxu0 %v93
    %v355 = vpop.f32.mrf.mxu0
    %v356 = vadd.f32 %v305, %v355
    %357 = vmatmul.f32.gmra.mxu0 %v95
    %v358 = vpop.f32.mrf.mxu0
    %v359 = vadd.f32 %v305, %v358
    %360 = vmatmul.f32.gmra.mxu0 %v97
    %v361 = vpop.f32.mrf.mxu0
    %v362 = vadd.f32 %v305, %v361
    %363 = vmatmul.f32.gmra.mxu0 %v99
    %v364 = vpop.f32.mrf.mxu0
    %v365 = vadd.f32 %v305, %v364
    %366 = vmatmul.f32.gmra.mxu0 %v101
    %v367 = vpop.f32.mrf.mxu0
    %v368 = vadd.f32 %v305, %v367
    %369 = vmatmul.f32.gmra.mxu0 %v103
    %v370 = vpop.f32.mrf.mxu0
    %v371 = vadd.f32 %v305, %v370
    %372 = vmatmul.f32.gmra.mxu0 %v105
    %v373 = vpop.f32.mrf.mxu0
    %v374 = vadd.f32 %v305, %v373
    %375 = vmatmul.f32.gmra.mxu0 %v107
    %v376 = vpop.f32.mrf.mxu0
    %v377 = vadd.f32 %v305, %v376
    %378 = vmatmul.f32.gmra.mxu0 %v109
    %v379 = vpop.f32.mrf.mxu0
    %v380 = vadd.f32 %v305, %v379
    %381 = vdwg.mxu0
    %382 = vmatpush.msra.mxu0 %v297
    %383 = vmatpush.msra.mxu0 %v291
    %384 = vmatpush.msra.mxu0 %v285
    %385 = vmatpush.msra.mxu0 %v279
    %386 = vmatpush.msra.mxu0 %v273
    %387 = vmatpush.msra.mxu0 %v267
    %388 = vmatpush.msra.mxu0 %v261
    %389 = vmatpush.msra.mxu0 %v255
    %390 = vmatpush.msra.mxu0 %v249
    %391 = vmatpush.msra.mxu0 %v243
    %392 = vmatpush.msra.mxu0 %v237
    %393 = vmatpush.msra.mxu0 %v231
    %394 = vmatpush.msra.mxu0 %v225
    %395 = vmatpush.msra.mxu0 %v219
    %396 = vmatpush.msra.mxu0 %v213
    %397 = vmatpush.msra.mxu0 %v207
    %398 = vmatmul.f32.gmra.mxu0 %v80
    %v399 = vpop.f32.mrf.mxu0
    %v400 = vadd.f32 %v335, %v399
    %401 = vmatmul.f32.gmra.mxu0 %v82
    %v402 = vpop.f32.mrf.mxu0
    %v403 = vadd.f32 %v338, %v402
    %404 = vmatmul.f32.gmra.mxu0 %v84
    %v405 = vpop.f32.mrf.mxu0
    %v406 = vadd.f32 %v341, %v405
    %407 = vmatmul.f32.gmra.mxu0 %v86
    %v408 = vpop.f32.mrf.mxu0
    %v409 = vadd.f32 %v344, %v408
    %410 = vmatmul.f32.gmra.mxu0 %v88
    %v411 = vpop.f32.mrf.mxu0
    %v412 = vadd.f32 %v347, %v411
    %413 = vmatmul.f32.gmra.mxu0 %v90
    %v414 = vpop.f32.mrf.mxu0
    %v415 = vadd.f32 %v350, %v414
    %416 = vmatmul.f32.gmra.mxu0 %v92
    %v417 = vpop.f32.mrf.mxu0
    %v418 = vadd.f32 %v353, %v417
    %419 = vmatmul.f32.gmra.mxu0 %v94
    %v420 = vpop.f32.mrf.mxu0
    %v421 = vadd.f32 %v356, %v420
    %422 = vmatmul.f32.gmra.mxu0 %v96
    %v423 = vpop.f32.mrf.mxu0
    %v424 = vadd.f32 %v359, %v423
    %425 = vmatmul.f32.gmra.mxu0 %v98
    %v426 = vpop.f32.mrf.mxu0
    %v427 = vadd.f32 %v362, %v426
    %428 = vmatmul.f32.gmra.mxu0 %v100
    %v429 = vpop.f32.mrf.mxu0
    %v430 = vadd.f32 %v365, %v429
    %431 = vmatmul.f32.gmra.mxu0 %v102
    %v432 = vpop.f32.mrf.mxu0
    %v433 = vadd.f32 %v368, %v432
    %434 = vmatmul.f32.gmra.mxu0 %v104
    %v435 = vpop.f32.mrf.mxu0
    %v436 = vadd.f32 %v371, %v435
    %437 = vmatmul.f32.gmra.mxu0 %v106
    %v438 = vpop.f32.mrf.mxu0
    %v439 = vadd.f32 %v374, %v438
    %440 = vmatmul.f32.gmra.mxu0 %v108
    %v441 = vpop.f32.mrf.mxu0
    %v442 = vadd.f32 %v377, %v441
    %443 = vmatmul.f32.gmra.mxu0 %v110
    %v444 = vpop.f32.mrf.mxu0
    %v445 = vadd.f32 %v380, %v444
    %446 = vdwg.mxu0
    %447 = vmatpush.msra.mxu0 %v202
    %448 = vmatpush.msra.mxu0 %v196
    %449 = vmatpush.msra.mxu0 %v190
    %450 = vmatpush.msra.mxu0 %v184
    %451 = vmatpush.msra.mxu0 %v178
    %452 = vmatpush.msra.mxu0 %v172
    %453 = vmatpush.msra.mxu0 %v166
    %454 = vmatpush.msra.mxu0 %v160
    %455 = vmatpush.msra.mxu0 %v154
    %456 = vmatpush.msra.mxu0 %v148
    %457 = vmatpush.msra.mxu0 %v142
    %458 = vmatpush.msra.mxu0 %v136
    %459 = vmatpush.msra.mxu0 %v130
    %460 = vmatpush.msra.mxu0 %v124
    %461 = vmatpush.msra.mxu0 %v118
    %462 = vmatpush.msra.mxu0 %v112
    %463 = vmatmul.f32.gmra.mxu0 %v79
    %v464 = vpop.f32.mrf.mxu0
    %v465 = vadd.f32 %v306, %v464
    %466 = vmatmul.f32.gmra.mxu0 %v81
    %v467 = vpop.f32.mrf.mxu0
    %v468 = vadd.f32 %v306, %v467
    %469 = vmatmul.f32.gmra.mxu0 %v83
    %v470 = vpop.f32.mrf.mxu0
    %v471 = vadd.f32 %v306, %v470
    %472 = vmatmul.f32.gmra.mxu0 %v85
    %v473 = vpop.f32.mrf.mxu0
    %v474 = vadd.f32 %v306, %v473
    %475 = vmatmul.f32.gmra.mxu0 %v87
    %v476 = vpop.f32.mrf.mxu0
    %v477 = vadd.f32 %v306, %v476
    %478 = vmatmul.f32.gmra.mxu0 %v89
    %v479 = vpop.f32.mrf.mxu0
    %v480 = vadd.f32 %v306, %v479
    %481 = vmatmul.f32.gmra.mxu0 %v91
    %v482 = vpop.f32.mrf.mxu0
    %v483 = vadd.f32 %v306, %v482
    %484 = vmatmul.f32.gmra.mxu0 %v93
    %v485 = vpop.f32.mrf.mxu0
    %v486 = vadd.f32 %v306, %v485
    %487 = vmatmul.f32.gmra.mxu0 %v95
    %v488 = vpop.f32.mrf.mxu0
    %v489 = vadd.f32 %v306, %v488
    %490 = vmatmul.f32.gmra.mxu0 %v97
    %v491 = vpop.f32.mrf.mxu0
    %v492 = vadd.f32 %v306, %v491
    %493 = vmatmul.f32.gmra.mxu0 %v99
    %v494 = vpop.f32.mrf.mxu0
    %v495 = vadd.f32 %v306, %v494
    %496 = vmatmul.f32.gmra.mxu0 %v101
    %v497 = vpop.f32.mrf.mxu0
    %v498 = vadd.f32 %v306, %v497
    %499 = vmatmul.f32.gmra.mxu0 %v103
    %v500 = vpop.f32.mrf.mxu0
    %v501 = vadd.f32 %v306, %v500
    %502 = vmatmul.f32.gmra.mxu0 %v105
    %v503 = vpop.f32.mrf.mxu0
    %v504 = vadd.f32 %v306, %v503
    %505 = vmatmul.f32.gmra.mxu0 %v107
    %v506 = vpop.f32.mrf.mxu0
    %v507 = vadd.f32 %v306, %v506
    %508 = vmatmul.f32.gmra.mxu0 %v109
    %v509 = vpop.f32.mrf.mxu0
    %v510 = vadd.f32 %v306, %v509
    %511 = vdwg.mxu0
    %512 = vmatpush.msra.mxu0 %v298
    %513 = vmatpush.msra.mxu0 %v292
    %514 = vmatpush.msra.mxu0 %v286
    %515 = vmatpush.msra.mxu0 %v280
    %516 = vmatpush.msra.mxu0 %v274
    %517 = vmatpush.msra.mxu0 %v268
    %518 = vmatpush.msra.mxu0 %v262
    %519 = vmatpush.msra.mxu0 %v256
    %520 = vmatpush.msra.mxu0 %v250
    %521 = vmatpush.msra.mxu0 %v244
    %522 = vmatpush.msra.mxu0 %v238
    %523 = vmatpush.msra.mxu0 %v232
    %524 = vmatpush.msra.mxu0 %v226
    %525 = vmatpush.msra.mxu0 %v220
    %526 = vmatpush.msra.mxu0 %v214
    %527 = vmatpush.msra.mxu0 %v208
    %528 = vmatmul.f32.gmra.mxu0 %v80
    %v529 = vpop.f32.mrf.mxu0
    %v530 = vadd.f32 %v465, %v529
    %531 = vmatmul.f32.gmra.mxu0 %v82
    %v532 = vpop.f32.mrf.mxu0
    %v533 = vadd.f32 %v468, %v532
    %534 = vmatmul.f32.gmra.mxu0 %v84
    %v535 = vpop.f32.mrf.mxu0
    %v536 = vadd.f32 %v471, %v535
    %537 = vmatmul.f32.gmra.mxu0 %v86
    %v538 = vpop.f32.mrf.mxu0
    %v539 = vadd.f32 %v474, %v538
    %540 = vmatmul.f32.gmra.mxu0 %v88
    %v541 = vpop.f32.mrf.mxu0
    %v542 = vadd.f32 %v477, %v541
    %543 = vmatmul.f32.gmra.mxu0 %v90
    %v544 = vpop.f32.mrf.mxu0
    %v545 = vadd.f32 %v480, %v544
    %546 = vmatmul.f32.gmra.mxu0 %v92
    %v547 = vpop.f32.mrf.mxu0
    %v548 = vadd.f32 %v483, %v547
    %549 = vmatmul.f32.gmra.mxu0 %v94
    %v550 = vpop.f32.mrf.mxu0
    %v551 = vadd.f32 %v486, %v550
    %552 = vmatmul.f32.gmra.mxu0 %v96
    %v553 = vpop.f32.mrf.mxu0
    %v554 = vadd.f32 %v489, %v553
    %555 = vmatmul.f32.gmra.mxu0 %v98
    %v556 = vpop.f32.mrf.mxu0
    %v557 = vadd.f32 %v492, %v556
    %558 = vmatmul.f32.gmra.mxu0 %v100
    %v559 = vpop.f32.mrf.mxu0
    %v560 = vadd.f32 %v495, %v559
    %561 = vmatmul.f32.gmra.mxu0 %v102
    %v562 = vpop.f32.mrf.mxu0
    %v563 = vadd.f32 %v498, %v562
    %564 = vmatmul.f32.gmra.mxu0 %v104
    %v565 = vpop.f32.mrf.mxu0
    %v566 = vadd.f32 %v501, %v565
    %567 = vmatmul.f32.gmra.mxu0 %v106
    %v568 = vpop.f32.mrf.mxu0
    %v569 = vadd.f32 %v504, %v568
    %570 = vmatmul.f32.gmra.mxu0 %v108
    %v571 = vpop.f32.mrf.mxu0
    %v572 = vadd.f32 %v507, %v571
    %573 = vmatmul.f32.gmra.mxu0 %v110
    %v574 = vpop.f32.mrf.mxu0
    %v575 = vadd.f32 %v510, %v574
    %576 = vdwg.mxu0
    %577 = vmatpush.msra.mxu0 %v203
    %578 = vmatpush.msra.mxu0 %v197
    %579 = vmatpush.msra.mxu0 %v191
    %580 = vmatpush.msra.mxu0 %v185
    %581 = vmatpush.msra.mxu0 %v179
    %582 = vmatpush.msra.mxu0 %v173
    %583 = vmatpush.msra.mxu0 %v167
    %584 = vmatpush.msra.mxu0 %v161
    %585 = vmatpush.msra.mxu0 %v155
    %586 = vmatpush.msra.mxu0 %v149
    %587 = vmatpush.msra.mxu0 %v143
    %588 = vmatpush.msra.mxu0 %v137
    %589 = vmatpush.msra.mxu0 %v131
    %590 = vmatpush.msra.mxu0 %v125
    %591 = vmatpush.msra.mxu0 %v119
    %592 = vmatpush.msra.mxu0 %v113
    %593 = vmatmul.f32.gmra.mxu0 %v79
    %v594 = vpop.f32.mrf.mxu0
    %v595 = vadd.f32 %v307, %v594
    %596 = vmatmul.f32.gmra.mxu0 %v81
    %v597 = vpop.f32.mrf.mxu0
    %v598 = vadd.f32 %v307, %v597
    %599 = vmatmul.f32.gmra.mxu0 %v83
    %v600 = vpop.f32.mrf.mxu0
    %v601 = vadd.f32 %v307, %v600
    %602 = vmatmul.f32.gmra.mxu0 %v85
    %v603 = vpop.f32.mrf.mxu0
    %v604 = vadd.f32 %v307, %v603
    %605 = vmatmul.f32.gmra.mxu0 %v87
    %v606 = vpop.f32.mrf.mxu0
    %v607 = vadd.f32 %v307, %v606
    %608 = vmatmul.f32.gmra.mxu0 %v89
    %v609 = vpop.f32.mrf.mxu0
    %v610 = vadd.f32 %v307, %v609
    %611 = vmatmul.f32.gmra.mxu0 %v91
    %v612 = vpop.f32.mrf.mxu0
    %v613 = vadd.f32 %v307, %v612
    %614 = vmatmul.f32.gmra.mxu0 %v93
    %v615 = vpop.f32.mrf.mxu0
    %v616 = vadd.f32 %v307, %v615
    %617 = vmatmul.f32.gmra.mxu0 %v95
    %v618 = vpop.f32.mrf.mxu0
    %v619 = vadd.f32 %v307, %v618
    %620 = vmatmul.f32.gmra.mxu0 %v97
    %v621 = vpop.f32.mrf.mxu0
    %v622 = vadd.f32 %v307, %v621
    %623 = vmatmul.f32.gmra.mxu0 %v99
    %v624 = vpop.f32.mrf.mxu0
    %v625 = vadd.f32 %v307, %v624
    %626 = vmatmul.f32.gmra.mxu0 %v101
    %v627 = vpop.f32.mrf.mxu0
    %v628 = vadd.f32 %v307, %v627
    %629 = vmatmul.f32.gmra.mxu0 %v103
    %v630 = vpop.f32.mrf.mxu0
    %v631 = vadd.f32 %v307, %v630
    %632 = vmatmul.f32.gmra.mxu0 %v105
    %v633 = vpop.f32.mrf.mxu0
    %v634 = vadd.f32 %v307, %v633
    %635 = vmatmul.f32.gmra.mxu0 %v107
    %v636 = vpop.f32.mrf.mxu0
    %v637 = vadd.f32 %v307, %v636
    %638 = vmatmul.f32.gmra.mxu0 %v109
    %v639 = vpop.f32.mrf.mxu0
    %v640 = vadd.f32 %v307, %v639
    %641 = vdwg.mxu0
    %642 = vmatpush.msra.mxu0 %v299
    %643 = vmatpush.msra.mxu0 %v293
    %644 = vmatpush.msra.mxu0 %v287
    %645 = vmatpush.msra.mxu0 %v281
    %646 = vmatpush.msra.mxu0 %v275
    %647 = vmatpush.msra.mxu0 %v269
    %648 = vmatpush.msra.mxu0 %v263
    %649 = vmatpush.msra.mxu0 %v257
    %650 = vmatpush.msra.mxu0 %v251
    %651 = vmatpush.msra.mxu0 %v245
    %652 = vmatpush.msra.mxu0 %v239
    %653 = vmatpush.msra.mxu0 %v233
    %654 = vmatpush.msra.mxu0 %v227
    %655 = vmatpush.msra.mxu0 %v221
    %656 = vmatpush.msra.mxu0 %v215
    %657 = vmatpush.msra.mxu0 %v209
    %658 = vmatmul.f32.gmra.mxu0 %v80
    %v659 = vpop.f32.mrf.mxu0
    %v660 = vadd.f32 %v595, %v659
    %661 = vmatmul.f32.gmra.mxu0 %v82
    %v662 = vpop.f32.mrf.mxu0
    %v663 = vadd.f32 %v598, %v662
    %664 = vmatmul.f32.gmra.mxu0 %v84
    %v665 = vpop.f32.mrf.mxu0
    %v666 = vadd.f32 %v601, %v665
    %667 = vmatmul.f32.gmra.mxu0 %v86
    %v668 = vpop.f32.mrf.mxu0
    %v669 = vadd.f32 %v604, %v668
    %670 = vmatmul.f32.gmra.mxu0 %v88
    %v671 = vpop.f32.mrf.mxu0
    %v672 = vadd.f32 %v607, %v671
    %673 = vmatmul.f32.gmra.mxu0 %v90
    %v674 = vpop.f32.mrf.mxu0
    %v675 = vadd.f32 %v610, %v674
    %676 = vmatmul.f32.gmra.mxu0 %v92
    %v677 = vpop.f32.mrf.mxu0
    %v678 = vadd.f32 %v613, %v677
    %679 = vmatmul.f32.gmra.mxu0 %v94
    %v680 = vpop.f32.mrf.mxu0
    %v681 = vadd.f32 %v616, %v680
    %682 = vmatmul.f32.gmra.mxu0 %v96
    %v683 = vpop.f32.mrf.mxu0
    %v684 = vadd.f32 %v619, %v683
    %685 = vmatmul.f32.gmra.mxu0 %v98
    %v686 = vpop.f32.mrf.mxu0
    %v687 = vadd.f32 %v622, %v686
    %688 = vmatmul.f32.gmra.mxu0 %v100
    %v689 = vpop.f32.mrf.mxu0
    %v690 = vadd.f32 %v625, %v689
    %691 = vmatmul.f32.gmra.mxu0 %v102
    %v692 = vpop.f32.mrf.mxu0
    %v693 = vadd.f32 %v628, %v692
    %694 = vmatmul.f32.gmra.mxu0 %v104
    %v695 = vpop.f32.mrf.mxu0
    %v696 = vadd.f32 %v631, %v695
    %697 = vmatmul.f32.gmra.mxu0 %v106
    %v698 = vpop.f32.mrf.mxu0
    %v699 = vadd.f32 %v634, %v698
    %700 = vmatmul.f32.gmra.mxu0 %v108
    %v701 = vpop.f32.mrf.mxu0
    %v702 = vadd.f32 %v637, %v701
    %703 = vmatmul.f32.gmra.mxu0 %v110
    %v704 = vpop.f32.mrf.mxu0
    %v705 = vadd.f32 %v640, %v704
    %706 = vdwg.mxu0
    %707 = vmatpush.msra.mxu0 %v204
    %708 = vmatpush.msra.mxu0 %v198
    %709 = vmatpush.msra.mxu0 %v192
    %710 = vmatpush.msra.mxu0 %v186
    %711 = vmatpush.msra.mxu0 %v180
    %712 = vmatpush.msra.mxu0 %v174
    %713 = vmatpush.msra.mxu0 %v168
    %714 = vmatpush.msra.mxu0 %v162
    %715 = vmatpush.msra.mxu0 %v156
    %716 = vmatpush.msra.mxu0 %v150
    %717 = vmatpush.msra.mxu0 %v144
    %718 = vmatpush.msra.mxu0 %v138
    %719 = vmatpush.msra.mxu0 %v132
    %720 = vmatpush.msra.mxu0 %v126
    %721 = vmatpush.msra.mxu0 %v120
    %722 = vmatpush.msra.mxu0 %v114
    %723 = vmatmul.f32.gmra.mxu0 %v79
    %v724 = vpop.f32.mrf.mxu0
    %v725 = vadd.f32 %v308, %v724
    %726 = vmatmul.f32.gmra.mxu0 %v81
    %v727 = vpop.f32.mrf.mxu0
    %v728 = vadd.f32 %v308, %v727
    %729 = vmatmul.f32.gmra.mxu0 %v83
    %v730 = vpop.f32.mrf.mxu0
    %v731 = vadd.f32 %v308, %v730
    %732 = vmatmul.f32.gmra.mxu0 %v85
    %v733 = vpop.f32.mrf.mxu0
    %v734 = vadd.f32 %v308, %v733
    %735 = vmatmul.f32.gmra.mxu0 %v87
    %v736 = vpop.f32.mrf.mxu0
    %v737 = vadd.f32 %v308, %v736
    %738 = vmatmul.f32.gmra.mxu0 %v89
    %v739 = vpop.f32.mrf.mxu0
    %v740 = vadd.f32 %v308, %v739
    %741 = vmatmul.f32.gmra.mxu0 %v91
    %v742 = vpop.f32.mrf.mxu0
    %v743 = vadd.f32 %v308, %v742
    %744 = vmatmul.f32.gmra.mxu0 %v93
    %v745 = vpop.f32.mrf.mxu0
    %v746 = vadd.f32 %v308, %v745
    %747 = vmatmul.f32.gmra.mxu0 %v95
    %v748 = vpop.f32.mrf.mxu0
    %v749 = vadd.f32 %v308, %v748
    %750 = vmatmul.f32.gmra.mxu0 %v97
    %v751 = vpop.f32.mrf.mxu0
    %v752 = vadd.f32 %v308, %v751
    %753 = vmatmul.f32.gmra.mxu0 %v99
    %v754 = vpop.f32.mrf.mxu0
    %v755 = vadd.f32 %v308, %v754
    %756 = vmatmul.f32.gmra.mxu0 %v101
    %v757 = vpop.f32.mrf.mxu0
    %v758 = vadd.f32 %v308, %v757
    %759 = vmatmul.f32.gmra.mxu0 %v103
    %v760 = vpop.f32.mrf.mxu0
    %v761 = vadd.f32 %v308, %v760
    %762 = vmatmul.f32.gmra.mxu0 %v105
    %v763 = vpop.f32.mrf.mxu0
    %v764 = vadd.f32 %v308, %v763
    %765 = vmatmul.f32.gmra.mxu0 %v107
    %v766 = vpop.f32.mrf.mxu0
    %v767 = vadd.f32 %v308, %v766
    %768 = vmatmul.f32.gmra.mxu0 %v109
    %v769 = vpop.f32.mrf.mxu0
    %v770 = vadd.f32 %v308, %v769
    %771 = vdwg.mxu0
    %772 = vmatpush.msra.mxu0 %v300
    %773 = vmatpush.msra.mxu0 %v294
    %774 = vmatpush.msra.mxu0 %v288
    %775 = vmatpush.msra.mxu0 %v282
    %776 = vmatpush.msra.mxu0 %v276
    %777 = vmatpush.msra.mxu0 %v270
    %778 = vmatpush.msra.mxu0 %v264
    %779 = vmatpush.msra.mxu0 %v258
    %780 = vmatpush.msra.mxu0 %v252
    %781 = vmatpush.msra.mxu0 %v246
    %782 = vmatpush.msra.mxu0 %v240
    %783 = vmatpush.msra.mxu0 %v234
    %784 = vmatpush.msra.mxu0 %v228
    %785 = vmatpush.msra.mxu0 %v222
    %786 = vmatpush.msra.mxu0 %v216
    %787 = vmatpush.msra.mxu0 %v210
    %788 = vmatmul.f32.gmra.mxu0 %v80
    %v789 = vpop.f32.mrf.mxu0
    %v790 = vadd.f32 %v725, %v789
    %791 = vmatmul.f32.gmra.mxu0 %v82
    %v792 = vpop.f32.mrf.mxu0
    %v793 = vadd.f32 %v728, %v792
    %794 = vmatmul.f32.gmra.mxu0 %v84
    %v795 = vpop.f32.mrf.mxu0
    %v796 = vadd.f32 %v731, %v795
    %797 = vmatmul.f32.gmra.mxu0 %v86
    %v798 = vpop.f32.mrf.mxu0
    %v799 = vadd.f32 %v734, %v798
    %800 = vmatmul.f32.gmra.mxu0 %v88
    %v801 = vpop.f32.mrf.mxu0
    %v802 = vadd.f32 %v737, %v801
    %803 = vmatmul.f32.gmra.mxu0 %v90
    %v804 = vpop.f32.mrf.mxu0
    %v805 = vadd.f32 %v740, %v804
    %806 = vmatmul.f32.gmra.mxu0 %v92
    %v807 = vpop.f32.mrf.mxu0
    %v808 = vadd.f32 %v743, %v807
    %809 = vmatmul.f32.gmra.mxu0 %v94
    %v810 = vpop.f32.mrf.mxu0
    %v811 = vadd.f32 %v746, %v810
    %812 = vmatmul.f32.gmra.mxu0 %v96
    %v813 = vpop.f32.mrf.mxu0
    %v814 = vadd.f32 %v749, %v813
    %815 = vmatmul.f32.gmra.mxu0 %v98
    %v816 = vpop.f32.mrf.mxu0
    %v817 = vadd.f32 %v752, %v816
    %818 = vmatmul.f32.gmra.mxu0 %v100
    %v819 = vpop.f32.mrf.mxu0
    %v820 = vadd.f32 %v755, %v819
    %821 = vmatmul.f32.gmra.mxu0 %v102
    %v822 = vpop.f32.mrf.mxu0
    %v823 = vadd.f32 %v758, %v822
    %824 = vmatmul.f32.gmra.mxu0 %v104
    %v825 = vpop.f32.mrf.mxu0
    %v826 = vadd.f32 %v761, %v825
    %827 = vmatmul.f32.gmra.mxu0 %v106
    %v828 = vpop.f32.mrf.mxu0
    %v829 = vadd.f32 %v764, %v828
    %830 = vmatmul.f32.gmra.mxu0 %v108
    %v831 = vpop.f32.mrf.mxu0
    %v832 = vadd.f32 %v767, %v831
    %833 = vmatmul.f32.gmra.mxu0 %v110
    %v834 = vpop.f32.mrf.mxu0
    %v835 = vadd.f32 %v770, %v834
    %836 = vdwg.mxu0
    %837 = vmatpush.msra.mxu0 %v205
    %838 = vmatpush.msra.mxu0 %v199
    %839 = vmatpush.msra.mxu0 %v193
    %840 = vmatpush.msra.mxu0 %v187
    %841 = vmatpush.msra.mxu0 %v181
    %842 = vmatpush.msra.mxu0 %v175
    %843 = vmatpush.msra.mxu0 %v169
    %844 = vmatpush.msra.mxu0 %v163
    %845 = vmatpush.msra.mxu0 %v157
    %846 = vmatpush.msra.mxu0 %v151
    %847 = vmatpush.msra.mxu0 %v145
    %848 = vmatpush.msra.mxu0 %v139
    %849 = vmatpush.msra.mxu0 %v133
    %850 = vmatpush.msra.mxu0 %v127
    %851 = vmatpush.msra.mxu0 %v121
    %852 = vmatpush.msra.mxu0 %v115
    %853 = vmatmul.f32.gmra.mxu0 %v79
    %v854 = vpop.f32.mrf.mxu0
    %v855 = vadd.f32 %v309, %v854
    %856 = vmatmul.f32.gmra.mxu0 %v81
    %v857 = vpop.f32.mrf.mxu0
    %v858 = vadd.f32 %v309, %v857
    %859 = vmatmul.f32.gmra.mxu0 %v83
    %v860 = vpop.f32.mrf.mxu0
    %v861 = vadd.f32 %v309, %v860
    %862 = vmatmul.f32.gmra.mxu0 %v85
    %v863 = vpop.f32.mrf.mxu0
    %v864 = vadd.f32 %v309, %v863
    %865 = vmatmul.f32.gmra.mxu0 %v87
    %v866 = vpop.f32.mrf.mxu0
    %v867 = vadd.f32 %v309, %v866
    %868 = vmatmul.f32.gmra.mxu0 %v89
    %v869 = vpop.f32.mrf.mxu0
    %v870 = vadd.f32 %v309, %v869
    %871 = vmatmul.f32.gmra.mxu0 %v91
    %v872 = vpop.f32.mrf.mxu0
    %v873 = vadd.f32 %v309, %v872
    %874 = vmatmul.f32.gmra.mxu0 %v93
    %v875 = vpop.f32.mrf.mxu0
    %v876 = vadd.f32 %v309, %v875
    %877 = vmatmul.f32.gmra.mxu0 %v95
    %v878 = vpop.f32.mrf.mxu0
    %v879 = vadd.f32 %v309, %v878
    %880 = vmatmul.f32.gmra.mxu0 %v97
    %v881 = vpop.f32.mrf.mxu0
    %v882 = vadd.f32 %v309, %v881
    %883 = vmatmul.f32.gmra.mxu0 %v99
    %v884 = vpop.f32.mrf.mxu0
    %v885 = vadd.f32 %v309, %v884
    %886 = vmatmul.f32.gmra.mxu0 %v101
    %v887 = vpop.f32.mrf.mxu0
    %v888 = vadd.f32 %v309, %v887
    %889 = vmatmul.f32.gmra.mxu0 %v103
    %v890 = vpop.f32.mrf.mxu0
    %v891 = vadd.f32 %v309, %v890
    %892 = vmatmul.f32.gmra.mxu0 %v105
    %v893 = vpop.f32.mrf.mxu0
    %v894 = vadd.f32 %v309, %v893
    %895 = vmatmul.f32.gmra.mxu0 %v107
    %v896 = vpop.f32.mrf.mxu0
    %v897 = vadd.f32 %v309, %v896
    %898 = vmatmul.f32.gmra.mxu0 %v109
    %v899 = vpop.f32.mrf.mxu0
    %v900 = vadd.f32 %v309, %v899
    %901 = vdwg.mxu0
    %902 = vmatpush.msra.mxu0 %v301
    %903 = vmatpush.msra.mxu0 %v295
    %904 = vmatpush.msra.mxu0 %v289
    %905 = vmatpush.msra.mxu0 %v283
    %906 = vmatpush.msra.mxu0 %v277
    %907 = vmatpush.msra.mxu0 %v271
    %908 = vmatpush.msra.mxu0 %v265
    %909 = vmatpush.msra.mxu0 %v259
    %910 = vmatpush.msra.mxu0 %v253
    %911 = vmatpush.msra.mxu0 %v247
    %912 = vmatpush.msra.mxu0 %v241
    %913 = vmatpush.msra.mxu0 %v235
    %914 = vmatpush.msra.mxu0 %v229
    %915 = vmatpush.msra.mxu0 %v223
    %916 = vmatpush.msra.mxu0 %v217
    %917 = vmatpush.msra.mxu0 %v211
    %918 = vmatmul.f32.gmra.mxu0 %v80
    %v919 = vpop.f32.mrf.mxu0
    %v920 = vadd.f32 %v855, %v919
    %921 = vmatmul.f32.gmra.mxu0 %v82
    %v922 = vpop.f32.mrf.mxu0
    %v923 = vadd.f32 %v858, %v922
    %924 = vmatmul.f32.gmra.mxu0 %v84
    %v925 = vpop.f32.mrf.mxu0
    %v926 = vadd.f32 %v861, %v925
    %927 = vmatmul.f32.gmra.mxu0 %v86
    %v928 = vpop.f32.mrf.mxu0
    %v929 = vadd.f32 %v864, %v928
    %930 = vmatmul.f32.gmra.mxu0 %v88
    %v931 = vpop.f32.mrf.mxu0
    %v932 = vadd.f32 %v867, %v931
    %933 = vmatmul.f32.gmra.mxu0 %v90
    %v934 = vpop.f32.mrf.mxu0
    %v935 = vadd.f32 %v870, %v934
    %936 = vmatmul.f32.gmra.mxu0 %v92
    %v937 = vpop.f32.mrf.mxu0
    %v938 = vadd.f32 %v873, %v937
    %939 = vmatmul.f32.gmra.mxu0 %v94
    %v940 = vpop.f32.mrf.mxu0
    %v941 = vadd.f32 %v876, %v940
    %942 = vmatmul.f32.gmra.mxu0 %v96
    %v943 = vpop.f32.mrf.mxu0
    %v944 = vadd.f32 %v879, %v943
    %945 = vmatmul.f32.gmra.mxu0 %v98
    %v946 = vpop.f32.mrf.mxu0
    %v947 = vadd.f32 %v882, %v946
    %948 = vmatmul.f32.gmra.mxu0 %v100
    %v949 = vpop.f32.mrf.mxu0
    %v950 = vadd.f32 %v885, %v949
    %951 = vmatmul.f32.gmra.mxu0 %v102
    %v952 = vpop.f32.mrf.mxu0
    %v953 = vadd.f32 %v888, %v952
    %954 = vmatmul.f32.gmra.mxu0 %v104
    %v955 = vpop.f32.mrf.mxu0
    %v956 = vadd.f32 %v891, %v955
    %957 = vmatmul.f32.gmra.mxu0 %v106
    %v958 = vpop.f32.mrf.mxu0
    %v959 = vadd.f32 %v894, %v958
    %960 = vmatmul.f32.gmra.mxu0 %v108
    %v961 = vpop.f32.mrf.mxu0
    %v962 = vadd.f32 %v897, %v961
    %963 = vmatmul.f32.gmra.mxu0 %v110
    %v964 = vpop.f32.mrf.mxu0
    %v965 = vadd.f32 %v900, %v964
    %966 = vdwg.mxu0
    %967 = vmatpush.msra.mxu0 %v206
    %968 = vmatpush.msra.mxu0 %v200
    %969 = vmatpush.msra.mxu0 %v194
    %970 = vmatpush.msra.mxu0 %v188
    %971 = vmatpush.msra.mxu0 %v182
    %972 = vmatpush.msra.mxu0 %v176
    %973 = vmatpush.msra.mxu0 %v170
    %974 = vmatpush.msra.mxu0 %v164
    %975 = vmatpush.msra.mxu0 %v158
    %976 = vmatpush.msra.mxu0 %v152
    %977 = vmatpush.msra.mxu0 %v146
    %978 = vmatpush.msra.mxu0 %v140
    %979 = vmatpush.msra.mxu0 %v134
    %980 = vmatpush.msra.mxu0 %v128
    %981 = vmatpush.msra.mxu0 %v122
    %982 = vmatpush.msra.mxu0 %v116
    %983 = vmatmul.f32.gmra.mxu0 %v79
    %v984 = vpop.f32.mrf.mxu0
    %v985 = vadd.f32 %v310, %v984
    %986 = vmatmul.f32.gmra.mxu0 %v81
    %v987 = vpop.f32.mrf.mxu0
    %v988 = vadd.f32 %v310, %v987
    %989 = vmatmul.f32.gmra.mxu0 %v83
    %v990 = vpop.f32.mrf.mxu0
    %v991 = vadd.f32 %v310, %v990
    %992 = vmatmul.f32.gmra.mxu0 %v85
    %v993 = vpop.f32.mrf.mxu0
    %v994 = vadd.f32 %v310, %v993
    %995 = vmatmul.f32.gmra.mxu0 %v87
    %v996 = vpop.f32.mrf.mxu0
    %v997 = vadd.f32 %v310, %v996
    %998 = vmatmul.f32.gmra.mxu0 %v89
    %v999 = vpop.f32.mrf.mxu0
    %v1000 = vadd.f32 %v310, %v999
    %1001 = vmatmul.f32.gmra.mxu0 %v91
    %v1002 = vpop.f32.mrf.mxu0
    %v1003 = vadd.f32 %v310, %v1002
    %1004 = vmatmul.f32.gmra.mxu0 %v93
    %v1005 = vpop.f32.mrf.mxu0
    %v1006 = vadd.f32 %v310, %v1005
    %1007 = vmatmul.f32.gmra.mxu0 %v95
    %v1008 = vpop.f32.mrf.mxu0
    %v1009 = vadd.f32 %v310, %v1008
    %1010 = vmatmul.f32.gmra.mxu0 %v97
    %v1011 = vpop.f32.mrf.mxu0
    %v1012 = vadd.f32 %v310, %v1011
    %1013 = vmatmul.f32.gmra.mxu0 %v99
    %v1014 = vpop.f32.mrf.mxu0
    %v1015 = vadd.f32 %v310, %v1014
    %1016 = vmatmul.f32.gmra.mxu0 %v101
    %v1017 = vpop.f32.mrf.mxu0
    %v1018 = vadd.f32 %v310, %v1017
    %1019 = vmatmul.f32.gmra.mxu0 %v103
    %v1020 = vpop.f32.mrf.mxu0
    %v1021 = vadd.f32 %v310, %v1020
    %1022 = vmatmul.f32.gmra.mxu0 %v105
    %v1023 = vpop.f32.mrf.mxu0
    %v1024 = vadd.f32 %v310, %v1023
    %1025 = vmatmul.f32.gmra.mxu0 %v107
    %v1026 = vpop.f32.mrf.mxu0
    %v1027 = vadd.f32 %v310, %v1026
    %1028 = vmatmul.f32.gmra.mxu0 %v109
    %v1029 = vpop.f32.mrf.mxu0
    %v1030 = vadd.f32 %v310, %v1029
    %1031 = vdwg.mxu0
    %1032 = vmatpush.msra.mxu0 %v302
    %1033 = vmatpush.msra.mxu0 %v296
    %1034 = vmatpush.msra.mxu0 %v290
    %1035 = vmatpush.msra.mxu0 %v284
    %1036 = vmatpush.msra.mxu0 %v278
    %1037 = vmatpush.msra.mxu0 %v272
    %1038 = vmatpush.msra.mxu0 %v266
    %1039 = vmatpush.msra.mxu0 %v260
    %1040 = vmatpush.msra.mxu0 %v254
    %1041 = vmatpush.msra.mxu0 %v248
    %1042 = vmatpush.msra.mxu0 %v242
    %1043 = vmatpush.msra.mxu0 %v236
    %1044 = vmatpush.msra.mxu0 %v230
    %1045 = vmatpush.msra.mxu0 %v224
    %1046 = vmatpush.msra.mxu0 %v218
    %1047 = vmatpush.msra.mxu0 %v212
    %1048 = vmatmul.f32.gmra.mxu0 %v80
    %v1049 = vpop.f32.mrf.mxu0
    %v1050 = vadd.f32 %v985, %v1049
    %1051 = vmatmul.f32.gmra.mxu0 %v82
    %v1052 = vpop.f32.mrf.mxu0
    %v1053 = vadd.f32 %v988, %v1052
    %1054 = vmatmul.f32.gmra.mxu0 %v84
    %v1055 = vpop.f32.mrf.mxu0
    %v1056 = vadd.f32 %v991, %v1055
    %1057 = vmatmul.f32.gmra.mxu0 %v86
    %v1058 = vpop.f32.mrf.mxu0
    %v1059 = vadd.f32 %v994, %v1058
    %1060 = vmatmul.f32.gmra.mxu0 %v88
    %v1061 = vpop.f32.mrf.mxu0
    %v1062 = vadd.f32 %v997, %v1061
    %1063 = vmatmul.f32.gmra.mxu0 %v90
    %v1064 = vpop.f32.mrf.mxu0
    %v1065 = vadd.f32 %v1000, %v1064
    %1066 = vmatmul.f32.gmra.mxu0 %v92
    %v1067 = vpop.f32.mrf.mxu0
    %v1068 = vadd.f32 %v1003, %v1067
    %1069 = vmatmul.f32.gmra.mxu0 %v94
    %v1070 = vpop.f32.mrf.mxu0
    %v1071 = vadd.f32 %v1006, %v1070
    %1072 = vmatmul.f32.gmra.mxu0 %v96
    %v1073 = vpop.f32.mrf.mxu0
    %v1074 = vadd.f32 %v1009, %v1073
    %1075 = vmatmul.f32.gmra.mxu0 %v98
    %v1076 = vpop.f32.mrf.mxu0
    %v1077 = vadd.f32 %v1012, %v1076
    %1078 = vmatmul.f32.gmra.mxu0 %v100
    %v1079 = vpop.f32.mrf.mxu0
    %v1080 = vadd.f32 %v1015, %v1079
    %1081 = vmatmul.f32.gmra.mxu0 %v102
    %v1082 = vpop.f32.mrf.mxu0
    %v1083 = vadd.f32 %v1018, %v1082
    %1084 = vmatmul.f32.gmra.mxu0 %v104
    %v1085 = vpop.f32.mrf.mxu0
    %v1086 = vadd.f32 %v1021, %v1085
    %1087 = vmatmul.f32.gmra.mxu0 %v106
    %v1088 = vpop.f32.mrf.mxu0
    %v1089 = vadd.f32 %v1024, %v1088
    %1090 = vmatmul.f32.gmra.mxu0 %v108
    %v1091 = vpop.f32.mrf.mxu0
    %v1092 = vadd.f32 %v1027, %v1091
    %1093 = vmatmul.f32.gmra.mxu0 %v110
    %v1094 = vpop.f32.mrf.mxu0
    %v1095 = vadd.f32 %v1030, %v1094
    %1096 = vdwg.mxu0
    %v1097 = vmax.f32 %v400, 0.0
    %v1098 = vmax.f32 %v530, 0.0
    %v1099 = vmax.f32 %v403, 0.0
    %v1100 = vmax.f32 %v533, 0.0
    %v1101 = vmax.f32 %v406, 0.0
    %v1102 = vmax.f32 %v536, 0.0
    %v1103 = vmax.f32 %v409, 0.0
    %v1104 = vmax.f32 %v539, 0.0
    %v1105 = vmax.f32 %v412, 0.0
    %v1106 = vmax.f32 %v542, 0.0
    %v1107 = vmax.f32 %v415, 0.0
    %v1108 = vmax.f32 %v545, 0.0
    %v1109 = vmax.f32 %v418, 0.0
    %v1110 = vmax.f32 %v548, 0.0
    %v1111 = vmax.f32 %v421, 0.0
    %v1112 = vmax.f32 %v551, 0.0
    %v1113 = vmax.f32 %v424, 0.0
    %v1114 = vmax.f32 %v554, 0.0
    %v1115 = vmax.f32 %v427, 0.0
    %v1116 = vmax.f32 %v557, 0.0
    %v1117 = vmax.f32 %v430, 0.0
    %v1118 = vmax.f32 %v560, 0.0
    %v1119 = vmax.f32 %v433, 0.0
    %v1120 = vmax.f32 %v563, 0.0
    %v1121 = vmax.f32 %v436, 0.0
    %v1122 = vmax.f32 %v566, 0.0
    %v1123 = vmax.f32 %v439, 0.0
    %v1124 = vmax.f32 %v569, 0.0
    %v1125 = vmax.f32 %v442, 0.0
    %v1126 = vmax.f32 %v572, 0.0
    %v1127 = vmax.f32 %v445, 0.0
    %v1128 = vmax.f32 %v575, 0.0
    %v1129 = vxor.u32 %v660, 2147483648
    %v1130 = vxor.u32 %v790, 2147483648
    %v1131 = vxor.u32 %v663, 2147483648
    %v1132 = vxor.u32 %v793, 2147483648
    %v1133 = vxor.u32 %v666, 2147483648
    %v1134 = vxor.u32 %v796, 2147483648
    %v1135 = vxor.u32 %v669, 2147483648
    %v1136 = vxor.u32 %v799, 2147483648
    %v1137 = vxor.u32 %v672, 2147483648
    %v1138 = vxor.u32 %v802, 2147483648
    %v1139 = vxor.u32 %v675, 2147483648
    %v1140 = vxor.u32 %v805, 2147483648
    %v1141 = vxor.u32 %v678, 2147483648
    %v1142 = vxor.u32 %v808, 2147483648
    %v1143 = vxor.u32 %v681, 2147483648
    %v1144 = vxor.u32 %v811, 2147483648
    %v1145 = vxor.u32 %v684, 2147483648
    %v1146 = vxor.u32 %v814, 2147483648
    %v1147 = vxor.u32 %v687, 2147483648
    %v1148 = vxor.u32 %v817, 2147483648
    %v1149 = vxor.u32 %v690, 2147483648
    %v1150 = vxor.u32 %v820, 2147483648
    %v1151 = vxor.u32 %v693, 2147483648
    %v1152 = vxor.u32 %v823, 2147483648
    %v1153 = vxor.u32 %v696, 2147483648
    %v1154 = vxor.u32 %v826, 2147483648
    %v1155 = vxor.u32 %v699, 2147483648
    %v1156 = vxor.u32 %v829, 2147483648
    %v1157 = vxor.u32 %v702, 2147483648
    %v1158 = vxor.u32 %v832, 2147483648
    %v1159 = vxor.u32 %v705, 2147483648
    %v1160 = vxor.u32 %v835, 2147483648
    %v1161 = vmul.f32 %v1129, 1.442695
    %v1162 = vpow.pop %v1161
    %v1163 = vmul.f32 %v1130, 1.442695
    %v1164 = vpow.pop %v1163
    %v1165 = vmul.f32 %v1131, 1.442695
    %v1166 = vpow.pop %v1165
    %v1167 = vmul.f32 %v1132, 1.442695
    %v1168 = vpow.pop %v1167
    %v1169 = vmul.f32 %v1133, 1.442695
    %v1170 = vpow.pop %v1169
    %v1171 = vmul.f32 %v1134, 1.442695
    %v1172 = vpow.pop %v1171
    %v1173 = vmul.f32 %v1135, 1.442695
    %v1174 = vpow.pop %v1173
    %v1175 = vmul.f32 %v1136, 1.442695
    %v1176 = vpow.pop %v1175
    %v1177 = vmul.f32 %v1137, 1.442695
    %v1178 = vpow.pop %v1177
    %v1179 = vmul.f32 %v1138, 1.442695
    %v1180 = vpow.pop %v1179
    %v1181 = vmul.f32 %v1139, 1.442695
    %v1182 = vpow.pop %v1181
    %v1183 = vmul.f32 %v1140, 1.442695
    %v1184 = vpow.pop %v1183
    %v1185 = vmul.f32 %v1141, 1.442695
    %v1186 = vpow.pop %v1185
    %v1187 = vmul.f32 %v1142, 1.442695
    %v1188 = vpow.pop %v1187
    %v1189 = vmul.f32 %v1143, 1.442695
    %v1190 = vpow.pop %v1189
    %v1191 = vmul.f32 %v1144, 1.442695
    %v1192 = vpow.pop %v1191
    %v1193 = vmul.f32 %v1145, 1.442695
    %v1194 = vpow.pop %v1193
    %v1195 = vmul.f32 %v1146, 1.442695
    %v1196 = vpow.pop %v1195
    %v1197 = vmul.f32 %v1147, 1.442695
    %v1198 = vpow.pop %v1197
    %v1199 = vmul.f32 %v1148, 1.442695
    %v1200 = vpow.pop %v1199
    %v1201 = vmul.f32 %v1149, 1.442695
    %v1202 = vpow.pop %v1201
    %v1203 = vmul.f32 %v1150, 1.442695
    %v1204 = vpow.pop %v1203
    %v1205 = vmul.f32 %v1151, 1.442695
    %v1206 = vpow.pop %v1205
    %v1207 = vmul.f32 %v1152, 1.442695
    %v1208 = vpow.pop %v1207
    %v1209 = vmul.f32 %v1153, 1.442695
    %v1210 = vpow.pop %v1209
    %v1211 = vmul.f32 %v1154, 1.442695
    %v1212 = vpow.pop %v1211
    %v1213 = vmul.f32 %v1155, 1.442695
    %v1214 = vpow.pop %v1213
    %v1215 = vmul.f32 %v1156, 1.442695
    %v1216 = vpow.pop %v1215
    %v1217 = vmul.f32 %v1157, 1.442695
    %v1218 = vpow.pop %v1217
    %v1219 = vmul.f32 %v1158, 1.442695
    %v1220 = vpow.pop %v1219
    %v1221 = vmul.f32 %v1159, 1.442695
    %v1222 = vpow.pop %v1221
    %v1223 = vmul.f32 %v1160, 1.442695
    %v1224 = vpow.pop %v1223
    %v1225 = vadd.f32 %v1162, 1.0
    %v1226 = vadd.f32 %v1164, 1.0
    %v1227 = vadd.f32 %v1166, 1.0
    %v1228 = vadd.f32 %v1168, 1.0
    %v1229 = vadd.f32 %v1170, 1.0
    %v1230 = vadd.f32 %v1172, 1.0
    %v1231 = vadd.f32 %v1174, 1.0
    %v1232 = vadd.f32 %v1176, 1.0
    %v1233 = vadd.f32 %v1178, 1.0
    %v1234 = vadd.f32 %v1180, 1.0
    %v1235 = vadd.f32 %v1182, 1.0
    %v1236 = vadd.f32 %v1184, 1.0
    %v1237 = vadd.f32 %v1186, 1.0
    %v1238 = vadd.f32 %v1188, 1.0
    %v1239 = vadd.f32 %v1190, 1.0
    %v1240 = vadd.f32 %v1192, 1.0
    %v1241 = vadd.f32 %v1194, 1.0
    %v1242 = vadd.f32 %v1196, 1.0
    %v1243 = vadd.f32 %v1198, 1.0
    %v1244 = vadd.f32 %v1200, 1.0
    %v1245 = vadd.f32 %v1202, 1.0
    %v1246 = vadd.f32 %v1204, 1.0
    %v1247 = vadd.f32 %v1206, 1.0
    %v1248 = vadd.f32 %v1208, 1.0
    %v1249 = vadd.f32 %v1210, 1.0
    %v1250 = vadd.f32 %v1212, 1.0
    %v1251 = vadd.f32 %v1214, 1.0
    %v1252 = vadd.f32 %v1216, 1.0
    %v1253 = vadd.f32 %v1218, 1.0
    %v1254 = vadd.f32 %v1220, 1.0
    %v1255 = vadd.f32 %v1222, 1.0
    %v1256 = vadd.f32 %v1224, 1.0
    %v1257 = vrcp.pop %v1225
    %v1258 = vmul.f32 %v1225, %v1257
    %v1259 = vsub.f32 1.0, %v1258
    %v1260 = vmul.f32 %v1257, %v1259
    %v1261 = vadd.f32 %v1257, %v1260
    %vm1262 = vweird.f32 %v1225
    %vm1263 = vweird.f32 %v1257
    %vm1264 = vmor %vm1262, %vm1263
    %v1265 = vsel %vm1264, %v1257, %v1261
    %v1266 = vand.u32 2147483647, %v1225
    %vm1267 = vcmp.eq.f32.partialorder %v1266, 8.507059e+37
    %v1268 = vand.u32 %v1225, 2147483648
    %v1269 = vor.u32 1.1754944e-38, %v1268
    %v1270 = vsel %vm1267, %v1269, %v1265
    %v1271 = vmul.f32 1.0, %v1270
    %v1272 = vrcp.pop %v1226
    %v1273 = vmul.f32 %v1226, %v1272
    %v1274 = vsub.f32 1.0, %v1273
    %v1275 = vmul.f32 %v1272, %v1274
    %v1276 = vadd.f32 %v1272, %v1275
    %vm1277 = vweird.f32 %v1226
    %vm1278 = vweird.f32 %v1272
    %vm1279 = vmor %vm1277, %vm1278
    %v1280 = vsel %vm1279, %v1272, %v1276
    %v1281 = vand.u32 2147483647, %v1226
    %vm1282 = vcmp.eq.f32.partialorder %v1281, 8.507059e+37
    %v1283 = vand.u32 %v1226, 2147483648
    %v1284 = vor.u32 1.1754944e-38, %v1283
    %v1285 = vsel %vm1282, %v1284, %v1280
    %v1286 = vmul.f32 1.0, %v1285
    %v1287 = vrcp.pop %v1227
    %v1288 = vmul.f32 %v1227, %v1287
    %v1289 = vsub.f32 1.0, %v1288
    %v1290 = vmul.f32 %v1287, %v1289
    %v1291 = vadd.f32 %v1287, %v1290
    %vm1292 = vweird.f32 %v1227
    %vm1293 = vweird.f32 %v1287
    %vm1294 = vmor %vm1292, %vm1293
    %v1295 = vsel %vm1294, %v1287, %v1291
    %v1296 = vand.u32 2147483647, %v1227
    %vm1297 = vcmp.eq.f32.partialorder %v1296, 8.507059e+37
    %v1298 = vand.u32 %v1227, 2147483648
    %v1299 = vor.u32 1.1754944e-38, %v1298
    %v1300 = vsel %vm1297, %v1299, %v1295
    %v1301 = vmul.f32 1.0, %v1300
    %v1302 = vrcp.pop %v1228
    %v1303 = vmul.f32 %v1228, %v1302
    %v1304 = vsub.f32 1.0, %v1303
    %v1305 = vmul.f32 %v1302, %v1304
    %v1306 = vadd.f32 %v1302, %v1305
    %vm1307 = vweird.f32 %v1228
    %vm1308 = vweird.f32 %v1302
    %vm1309 = vmor %vm1307, %vm1308
    %v1310 = vsel %vm1309, %v1302, %v1306
    %v1311 = vand.u32 2147483647, %v1228
    %vm1312 = vcmp.eq.f32.partialorder %v1311, 8.507059e+37
    %v1313 = vand.u32 %v1228, 2147483648
    %v1314 = vor.u32 1.1754944e-38, %v1313
    %v1315 = vsel %vm1312, %v1314, %v1310
    %v1316 = vmul.f32 1.0, %v1315
    %v1317 = vrcp.pop %v1229
    %v1318 = vmul.f32 %v1229, %v1317
    %v1319 = vsub.f32 1.0, %v1318
    %v1320 = vmul.f32 %v1317, %v1319
    %v1321 = vadd.f32 %v1317, %v1320
    %vm1322 = vweird.f32 %v1229
    %vm1323 = vweird.f32 %v1317
    %vm1324 = vmor %vm1322, %vm1323
    %v1325 = vsel %vm1324, %v1317, %v1321
    %v1326 = vand.u32 2147483647, %v1229
    %vm1327 = vcmp.eq.f32.partialorder %v1326, 8.507059e+37
    %v1328 = vand.u32 %v1229, 2147483648
    %v1329 = vor.u32 1.1754944e-38, %v1328
    %v1330 = vsel %vm1327, %v1329, %v1325
    %v1331 = vmul.f32 1.0, %v1330
    %v1332 = vrcp.pop %v1230
    %v1333 = vmul.f32 %v1230, %v1332
    %v1334 = vsub.f32 1.0, %v1333
    %v1335 = vmul.f32 %v1332, %v1334
    %v1336 = vadd.f32 %v1332, %v1335
    %vm1337 = vweird.f32 %v1230
    %vm1338 = vweird.f32 %v1332
    %vm1339 = vmor %vm1337, %vm1338
    %v1340 = vsel %vm1339, %v1332, %v1336
    %v1341 = vand.u32 2147483647, %v1230
    %vm1342 = vcmp.eq.f32.partialorder %v1341, 8.507059e+37
    %v1343 = vand.u32 %v1230, 2147483648
    %v1344 = vor.u32 1.1754944e-38, %v1343
    %v1345 = vsel %vm1342, %v1344, %v1340
    %v1346 = vmul.f32 1.0, %v1345
    %v1347 = vrcp.pop %v1231
    %v1348 = vmul.f32 %v1231, %v1347
    %v1349 = vsub.f32 1.0, %v1348
    %v1350 = vmul.f32 %v1347, %v1349
    %v1351 = vadd.f32 %v1347, %v1350
    %vm1352 = vweird.f32 %v1231
    %vm1353 = vweird.f32 %v1347
    %vm1354 = vmor %vm1352, %vm1353
    %v1355 = vsel %vm1354, %v1347, %v1351
    %v1356 = vand.u32 2147483647, %v1231
    %vm1357 = vcmp.eq.f32.partialorder %v1356, 8.507059e+37
    %v1358 = vand.u32 %v1231, 2147483648
    %v1359 = vor.u32 1.1754944e-38, %v1358
    %v1360 = vsel %vm1357, %v1359, %v1355
    %v1361 = vmul.f32 1.0, %v1360
    %v1362 = vrcp.pop %v1232
    %v1363 = vmul.f32 %v1232, %v1362
    %v1364 = vsub.f32 1.0, %v1363
    %v1365 = vmul.f32 %v1362, %v1364
    %v1366 = vadd.f32 %v1362, %v1365
    %vm1367 = vweird.f32 %v1232
    %vm1368 = vweird.f32 %v1362
    %vm1369 = vmor %vm1367, %vm1368
    %v1370 = vsel %vm1369, %v1362, %v1366
    %v1371 = vand.u32 2147483647, %v1232
    %vm1372 = vcmp.eq.f32.partialorder %v1371, 8.507059e+37
    %v1373 = vand.u32 %v1232, 2147483648
    %v1374 = vor.u32 1.1754944e-38, %v1373
    %v1375 = vsel %vm1372, %v1374, %v1370
    %v1376 = vmul.f32 1.0, %v1375
    %v1377 = vrcp.pop %v1233
    %v1378 = vmul.f32 %v1233, %v1377
    %v1379 = vsub.f32 1.0, %v1378
    %v1380 = vmul.f32 %v1377, %v1379
    %v1381 = vadd.f32 %v1377, %v1380
    %vm1382 = vweird.f32 %v1233
    %vm1383 = vweird.f32 %v1377
    %vm1384 = vmor %vm1382, %vm1383
    %v1385 = vsel %vm1384, %v1377, %v1381
    %v1386 = vand.u32 2147483647, %v1233
    %vm1387 = vcmp.eq.f32.partialorder %v1386, 8.507059e+37
    %v1388 = vand.u32 %v1233, 2147483648
    %v1389 = vor.u32 1.1754944e-38, %v1388
    %v1390 = vsel %vm1387, %v1389, %v1385
    %v1391 = vmul.f32 1.0, %v1390
    %v1392 = vrcp.pop %v1234
    %v1393 = vmul.f32 %v1234, %v1392
    %v1394 = vsub.f32 1.0, %v1393
    %v1395 = vmul.f32 %v1392, %v1394
    %v1396 = vadd.f32 %v1392, %v1395
    %vm1397 = vweird.f32 %v1234
    %vm1398 = vweird.f32 %v1392
    %vm1399 = vmor %vm1397, %vm1398
    %v1400 = vsel %vm1399, %v1392, %v1396
    %v1401 = vand.u32 2147483647, %v1234
    %vm1402 = vcmp.eq.f32.partialorder %v1401, 8.507059e+37
    %v1403 = vand.u32 %v1234, 2147483648
    %v1404 = vor.u32 1.1754944e-38, %v1403
    %v1405 = vsel %vm1402, %v1404, %v1400
    %v1406 = vmul.f32 1.0, %v1405
    %v1407 = vrcp.pop %v1235
    %v1408 = vmul.f32 %v1235, %v1407
    %v1409 = vsub.f32 1.0, %v1408
    %v1410 = vmul.f32 %v1407, %v1409
    %v1411 = vadd.f32 %v1407, %v1410
    %vm1412 = vweird.f32 %v1235
    %vm1413 = vweird.f32 %v1407
    %vm1414 = vmor %vm1412, %vm1413
    %v1415 = vsel %vm1414, %v1407, %v1411
    %v1416 = vand.u32 2147483647, %v1235
    %vm1417 = vcmp.eq.f32.partialorder %v1416, 8.507059e+37
    %v1418 = vand.u32 %v1235, 2147483648
    %v1419 = vor.u32 1.1754944e-38, %v1418
    %v1420 = vsel %vm1417, %v1419, %v1415
    %v1421 = vmul.f32 1.0, %v1420
    %v1422 = vrcp.pop %v1236
    %v1423 = vmul.f32 %v1236, %v1422
    %v1424 = vsub.f32 1.0, %v1423
    %v1425 = vmul.f32 %v1422, %v1424
    %v1426 = vadd.f32 %v1422, %v1425
    %vm1427 = vweird.f32 %v1236
    %vm1428 = vweird.f32 %v1422
    %vm1429 = vmor %vm1427, %vm1428
    %v1430 = vsel %vm1429, %v1422, %v1426
    %v1431 = vand.u32 2147483647, %v1236
    %vm1432 = vcmp.eq.f32.partialorder %v1431, 8.507059e+37
    %v1433 = vand.u32 %v1236, 2147483648
    %v1434 = vor.u32 1.1754944e-38, %v1433
    %v1435 = vsel %vm1432, %v1434, %v1430
    %v1436 = vmul.f32 1.0, %v1435
    %v1437 = vrcp.pop %v1237
    %v1438 = vmul.f32 %v1237, %v1437
    %v1439 = vsub.f32 1.0, %v1438
    %v1440 = vmul.f32 %v1437, %v1439
    %v1441 = vadd.f32 %v1437, %v1440
    %vm1442 = vweird.f32 %v1237
    %vm1443 = vweird.f32 %v1437
    %vm1444 = vmor %vm1442, %vm1443
    %v1445 = vsel %vm1444, %v1437, %v1441
    %v1446 = vand.u32 2147483647, %v1237
    %vm1447 = vcmp.eq.f32.partialorder %v1446, 8.507059e+37
    %v1448 = vand.u32 %v1237, 2147483648
    %v1449 = vor.u32 1.1754944e-38, %v1448
    %v1450 = vsel %vm1447, %v1449, %v1445
    %v1451 = vmul.f32 1.0, %v1450
    %v1452 = vrcp.pop %v1238
    %v1453 = vmul.f32 %v1238, %v1452
    %v1454 = vsub.f32 1.0, %v1453
    %v1455 = vmul.f32 %v1452, %v1454
    %v1456 = vadd.f32 %v1452, %v1455
    %vm1457 = vweird.f32 %v1238
    %vm1458 = vweird.f32 %v1452
    %vm1459 = vmor %vm1457, %vm1458
    %v1460 = vsel %vm1459, %v1452, %v1456
    %v1461 = vand.u32 2147483647, %v1238
    %vm1462 = vcmp.eq.f32.partialorder %v1461, 8.507059e+37
    %v1463 = vand.u32 %v1238, 2147483648
    %v1464 = vor.u32 1.1754944e-38, %v1463
    %v1465 = vsel %vm1462, %v1464, %v1460
    %v1466 = vmul.f32 1.0, %v1465
    %v1467 = vrcp.pop %v1239
    %v1468 = vmul.f32 %v1239, %v1467
    %v1469 = vsub.f32 1.0, %v1468
    %v1470 = vmul.f32 %v1467, %v1469
    %v1471 = vadd.f32 %v1467, %v1470
    %vm1472 = vweird.f32 %v1239
    %vm1473 = vweird.f32 %v1467
    %vm1474 = vmor %vm1472, %vm1473
    %v1475 = vsel %vm1474, %v1467, %v1471
    %v1476 = vand.u32 2147483647, %v1239
    %vm1477 = vcmp.eq.f32.partialorder %v1476, 8.507059e+37
    %v1478 = vand.u32 %v1239, 2147483648
    %v1479 = vor.u32 1.1754944e-38, %v1478
    %v1480 = vsel %vm1477, %v1479, %v1475
    %v1481 = vmul.f32 1.0, %v1480
    %v1482 = vrcp.pop %v1240
    %v1483 = vmul.f32 %v1240, %v1482
    %v1484 = vsub.f32 1.0, %v1483
    %v1485 = vmul.f32 %v1482, %v1484
    %v1486 = vadd.f32 %v1482, %v1485
    %vm1487 = vweird.f32 %v1240
    %vm1488 = vweird.f32 %v1482
    %vm1489 = vmor %vm1487, %vm1488
    %v1490 = vsel %vm1489, %v1482, %v1486
    %v1491 = vand.u32 2147483647, %v1240
    %vm1492 = vcmp.eq.f32.partialorder %v1491, 8.507059e+37
    %v1493 = vand.u32 %v1240, 2147483648
    %v1494 = vor.u32 1.1754944e-38, %v1493
    %v1495 = vsel %vm1492, %v1494, %v1490
    %v1496 = vmul.f32 1.0, %v1495
    %v1497 = vrcp.pop %v1241
    %v1498 = vmul.f32 %v1241, %v1497
    %v1499 = vsub.f32 1.0, %v1498
    %v1500 = vmul.f32 %v1497, %v1499
    %v1501 = vadd.f32 %v1497, %v1500
    %vm1502 = vweird.f32 %v1241
    %vm1503 = vweird.f32 %v1497
    %vm1504 = vmor %vm1502, %vm1503
    %v1505 = vsel %vm1504, %v1497, %v1501
    %v1506 = vand.u32 2147483647, %v1241
    %vm1507 = vcmp.eq.f32.partialorder %v1506, 8.507059e+37
    %v1508 = vand.u32 %v1241, 2147483648
    %v1509 = vor.u32 1.1754944e-38, %v1508
    %v1510 = vsel %vm1507, %v1509, %v1505
    %v1511 = vmul.f32 1.0, %v1510
    %v1512 = vrcp.pop %v1242
    %v1513 = vmul.f32 %v1242, %v1512
    %v1514 = vsub.f32 1.0, %v1513
    %v1515 = vmul.f32 %v1512, %v1514
    %v1516 = vadd.f32 %v1512, %v1515
    %vm1517 = vweird.f32 %v1242
    %vm1518 = vweird.f32 %v1512
    %vm1519 = vmor %vm1517, %vm1518
    %v1520 = vsel %vm1519, %v1512, %v1516
    %v1521 = vand.u32 2147483647, %v1242
    %vm1522 = vcmp.eq.f32.partialorder %v1521, 8.507059e+37
    %v1523 = vand.u32 %v1242, 2147483648
    %v1524 = vor.u32 1.1754944e-38, %v1523
    %v1525 = vsel %vm1522, %v1524, %v1520
    %v1526 = vmul.f32 1.0, %v1525
    %v1527 = vrcp.pop %v1243
    %v1528 = vmul.f32 %v1243, %v1527
    %v1529 = vsub.f32 1.0, %v1528
    %v1530 = vmul.f32 %v1527, %v1529
    %v1531 = vadd.f32 %v1527, %v1530
    %vm1532 = vweird.f32 %v1243
    %vm1533 = vweird.f32 %v1527
    %vm1534 = vmor %vm1532, %vm1533
    %v1535 = vsel %vm1534, %v1527, %v1531
    %v1536 = vand.u32 2147483647, %v1243
    %vm1537 = vcmp.eq.f32.partialorder %v1536, 8.507059e+37
    %v1538 = vand.u32 %v1243, 2147483648
    %v1539 = vor.u32 1.1754944e-38, %v1538
    %v1540 = vsel %vm1537, %v1539, %v1535
    %v1541 = vmul.f32 1.0, %v1540
    %v1542 = vrcp.pop %v1244
    %v1543 = vmul.f32 %v1244, %v1542
    %v1544 = vsub.f32 1.0, %v1543
    %v1545 = vmul.f32 %v1542, %v1544
    %v1546 = vadd.f32 %v1542, %v1545
    %vm1547 = vweird.f32 %v1244
    %vm1548 = vweird.f32 %v1542
    %vm1549 = vmor %vm1547, %vm1548
    %v1550 = vsel %vm1549, %v1542, %v1546
    %v1551 = vand.u32 2147483647, %v1244
    %vm1552 = vcmp.eq.f32.partialorder %v1551, 8.507059e+37
    %v1553 = vand.u32 %v1244, 2147483648
    %v1554 = vor.u32 1.1754944e-38, %v1553
    %v1555 = vsel %vm1552, %v1554, %v1550
    %v1556 = vmul.f32 1.0, %v1555
    %v1557 = vrcp.pop %v1245
    %v1558 = vmul.f32 %v1245, %v1557
    %v1559 = vsub.f32 1.0, %v1558
    %v1560 = vmul.f32 %v1557, %v1559
    %v1561 = vadd.f32 %v1557, %v1560
    %vm1562 = vweird.f32 %v1245
    %vm1563 = vweird.f32 %v1557
    %vm1564 = vmor %vm1562, %vm1563
    %v1565 = vsel %vm1564, %v1557, %v1561
    %v1566 = vand.u32 2147483647, %v1245
    %vm1567 = vcmp.eq.f32.partialorder %v1566, 8.507059e+37
    %v1568 = vand.u32 %v1245, 2147483648
    %v1569 = vor.u32 1.1754944e-38, %v1568
    %v1570 = vsel %vm1567, %v1569, %v1565
    %v1571 = vmul.f32 1.0, %v1570
    %v1572 = vrcp.pop %v1246
    %v1573 = vmul.f32 %v1246, %v1572
    %v1574 = vsub.f32 1.0, %v1573
    %v1575 = vmul.f32 %v1572, %v1574
    %v1576 = vadd.f32 %v1572, %v1575
    %vm1577 = vweird.f32 %v1246
    %vm1578 = vweird.f32 %v1572
    %vm1579 = vmor %vm1577, %vm1578
    %v1580 = vsel %vm1579, %v1572, %v1576
    %v1581 = vand.u32 2147483647, %v1246
    %vm1582 = vcmp.eq.f32.partialorder %v1581, 8.507059e+37
    %v1583 = vand.u32 %v1246, 2147483648
    %v1584 = vor.u32 1.1754944e-38, %v1583
    %v1585 = vsel %vm1582, %v1584, %v1580
    %v1586 = vmul.f32 1.0, %v1585
    %v1587 = vrcp.pop %v1247
    %v1588 = vmul.f32 %v1247, %v1587
    %v1589 = vsub.f32 1.0, %v1588
    %v1590 = vmul.f32 %v1587, %v1589
    %v1591 = vadd.f32 %v1587, %v1590
    %vm1592 = vweird.f32 %v1247
    %vm1593 = vweird.f32 %v1587
    %vm1594 = vmor %vm1592, %vm1593
    %v1595 = vsel %vm1594, %v1587, %v1591
    %v1596 = vand.u32 2147483647, %v1247
    %vm1597 = vcmp.eq.f32.partialorder %v1596, 8.507059e+37
    %v1598 = vand.u32 %v1247, 2147483648
    %v1599 = vor.u32 1.1754944e-38, %v1598
    %v1600 = vsel %vm1597, %v1599, %v1595
    %v1601 = vmul.f32 1.0, %v1600
    %v1602 = vrcp.pop %v1248
    %v1603 = vmul.f32 %v1248, %v1602
    %v1604 = vsub.f32 1.0, %v1603
    %v1605 = vmul.f32 %v1602, %v1604
    %v1606 = vadd.f32 %v1602, %v1605
    %vm1607 = vweird.f32 %v1248
    %vm1608 = vweird.f32 %v1602
    %vm1609 = vmor %vm1607, %vm1608
    %v1610 = vsel %vm1609, %v1602, %v1606
    %v1611 = vand.u32 2147483647, %v1248
    %vm1612 = vcmp.eq.f32.partialorder %v1611, 8.507059e+37
    %v1613 = vand.u32 %v1248, 2147483648
    %v1614 = vor.u32 1.1754944e-38, %v1613
    %v1615 = vsel %vm1612, %v1614, %v1610
    %v1616 = vmul.f32 1.0, %v1615
    %v1617 = vrcp.pop %v1249
    %v1618 = vmul.f32 %v1249, %v1617
    %v1619 = vsub.f32 1.0, %v1618
    %v1620 = vmul.f32 %v1617, %v1619
    %v1621 = vadd.f32 %v1617, %v1620
    %vm1622 = vweird.f32 %v1249
    %vm1623 = vweird.f32 %v1617
    %vm1624 = vmor %vm1622, %vm1623
    %v1625 = vsel %vm1624, %v1617, %v1621
    %v1626 = vand.u32 2147483647, %v1249
    %vm1627 = vcmp.eq.f32.partialorder %v1626, 8.507059e+37
    %v1628 = vand.u32 %v1249, 2147483648
    %v1629 = vor.u32 1.1754944e-38, %v1628
    %v1630 = vsel %vm1627, %v1629, %v1625
    %v1631 = vmul.f32 1.0, %v1630
    %v1632 = vrcp.pop %v1250
    %v1633 = vmul.f32 %v1250, %v1632
    %v1634 = vsub.f32 1.0, %v1633
    %v1635 = vmul.f32 %v1632, %v1634
    %v1636 = vadd.f32 %v1632, %v1635
    %vm1637 = vweird.f32 %v1250
    %vm1638 = vweird.f32 %v1632
    %vm1639 = vmor %vm1637, %vm1638
    %v1640 = vsel %vm1639, %v1632, %v1636
    %v1641 = vand.u32 2147483647, %v1250
    %vm1642 = vcmp.eq.f32.partialorder %v1641, 8.507059e+37
    %v1643 = vand.u32 %v1250, 2147483648
    %v1644 = vor.u32 1.1754944e-38, %v1643
    %v1645 = vsel %vm1642, %v1644, %v1640
    %v1646 = vmul.f32 1.0, %v1645
    %v1647 = vrcp.pop %v1251
    %v1648 = vmul.f32 %v1251, %v1647
    %v1649 = vsub.f32 1.0, %v1648
    %v1650 = vmul.f32 %v1647, %v1649
    %v1651 = vadd.f32 %v1647, %v1650
    %vm1652 = vweird.f32 %v1251
    %vm1653 = vweird.f32 %v1647
    %vm1654 = vmor %vm1652, %vm1653
    %v1655 = vsel %vm1654, %v1647, %v1651
    %v1656 = vand.u32 2147483647, %v1251
    %vm1657 = vcmp.eq.f32.partialorder %v1656, 8.507059e+37
    %v1658 = vand.u32 %v1251, 2147483648
    %v1659 = vor.u32 1.1754944e-38, %v1658
    %v1660 = vsel %vm1657, %v1659, %v1655
    %v1661 = vmul.f32 1.0, %v1660
    %v1662 = vrcp.pop %v1252
    %v1663 = vmul.f32 %v1252, %v1662
    %v1664 = vsub.f32 1.0, %v1663
    %v1665 = vmul.f32 %v1662, %v1664
    %v1666 = vadd.f32 %v1662, %v1665
    %vm1667 = vweird.f32 %v1252
    %vm1668 = vweird.f32 %v1662
    %vm1669 = vmor %vm1667, %vm1668
    %v1670 = vsel %vm1669, %v1662, %v1666
    %v1671 = vand.u32 2147483647, %v1252
    %vm1672 = vcmp.eq.f32.partialorder %v1671, 8.507059e+37
    %v1673 = vand.u32 %v1252, 2147483648
    %v1674 = vor.u32 1.1754944e-38, %v1673
    %v1675 = vsel %vm1672, %v1674, %v1670
    %v1676 = vmul.f32 1.0, %v1675
    %v1677 = vrcp.pop %v1253
    %v1678 = vmul.f32 %v1253, %v1677
    %v1679 = vsub.f32 1.0, %v1678
    %v1680 = vmul.f32 %v1677, %v1679
    %v1681 = vadd.f32 %v1677, %v1680
    %vm1682 = vweird.f32 %v1253
    %vm1683 = vweird.f32 %v1677
    %vm1684 = vmor %vm1682, %vm1683
    %v1685 = vsel %vm1684, %v1677, %v1681
    %v1686 = vand.u32 2147483647, %v1253
    %vm1687 = vcmp.eq.f32.partialorder %v1686, 8.507059e+37
    %v1688 = vand.u32 %v1253, 2147483648
    %v1689 = vor.u32 1.1754944e-38, %v1688
    %v1690 = vsel %vm1687, %v1689, %v1685
    %v1691 = vmul.f32 1.0, %v1690
    %v1692 = vrcp.pop %v1254
    %v1693 = vmul.f32 %v1254, %v1692
    %v1694 = vsub.f32 1.0, %v1693
    %v1695 = vmul.f32 %v1692, %v1694
    %v1696 = vadd.f32 %v1692, %v1695
    %vm1697 = vweird.f32 %v1254
    %vm1698 = vweird.f32 %v1692
    %vm1699 = vmor %vm1697, %vm1698
    %v1700 = vsel %vm1699, %v1692, %v1696
    %v1701 = vand.u32 2147483647, %v1254
    %vm1702 = vcmp.eq.f32.partialorder %v1701, 8.507059e+37
    %v1703 = vand.u32 %v1254, 2147483648
    %v1704 = vor.u32 1.1754944e-38, %v1703
    %v1705 = vsel %vm1702, %v1704, %v1700
    %v1706 = vmul.f32 1.0, %v1705
    %v1707 = vrcp.pop %v1255
    %v1708 = vmul.f32 %v1255, %v1707
    %v1709 = vsub.f32 1.0, %v1708
    %v1710 = vmul.f32 %v1707, %v1709
    %v1711 = vadd.f32 %v1707, %v1710
    %vm1712 = vweird.f32 %v1255
    %vm1713 = vweird.f32 %v1707
    %vm1714 = vmor %vm1712, %vm1713
    %v1715 = vsel %vm1714, %v1707, %v1711
    %v1716 = vand.u32 2147483647, %v1255
    %vm1717 = vcmp.eq.f32.partialorder %v1716, 8.507059e+37
    %v1718 = vand.u32 %v1255, 2147483648
    %v1719 = vor.u32 1.1754944e-38, %v1718
    %v1720 = vsel %vm1717, %v1719, %v1715
    %v1721 = vmul.f32 1.0, %v1720
    %v1722 = vrcp.pop %v1256
    %v1723 = vmul.f32 %v1256, %v1722
    %v1724 = vsub.f32 1.0, %v1723
    %v1725 = vmul.f32 %v1722, %v1724
    %v1726 = vadd.f32 %v1722, %v1725
    %vm1727 = vweird.f32 %v1256
    %vm1728 = vweird.f32 %v1722
    %vm1729 = vmor %vm1727, %vm1728
    %v1730 = vsel %vm1729, %v1722, %v1726
    %v1731 = vand.u32 2147483647, %v1256
    %vm1732 = vcmp.eq.f32.partialorder %v1731, 8.507059e+37
    %v1733 = vand.u32 %v1256, 2147483648
    %v1734 = vor.u32 1.1754944e-38, %v1733
    %v1735 = vsel %vm1732, %v1734, %v1730
    %v1736 = vmul.f32 1.0, %v1735
    %v1737 = vxor.u32 %v920, 2147483648
    %v1738 = vxor.u32 %v1050, 2147483648
    %v1739 = vxor.u32 %v923, 2147483648
    %v1740 = vxor.u32 %v1053, 2147483648
    %v1741 = vxor.u32 %v926, 2147483648
    %v1742 = vxor.u32 %v1056, 2147483648
    %v1743 = vxor.u32 %v929, 2147483648
    %v1744 = vxor.u32 %v1059, 2147483648
    %v1745 = vxor.u32 %v932, 2147483648
    %v1746 = vxor.u32 %v1062, 2147483648
    %v1747 = vxor.u32 %v935, 2147483648
    %v1748 = vxor.u32 %v1065, 2147483648
    %v1749 = vxor.u32 %v938, 2147483648
    %v1750 = vxor.u32 %v1068, 2147483648
    %v1751 = vxor.u32 %v941, 2147483648
    %v1752 = vxor.u32 %v1071, 2147483648
    %v1753 = vxor.u32 %v944, 2147483648
    %v1754 = vxor.u32 %v1074, 2147483648
    %v1755 = vxor.u32 %v947, 2147483648
    %v1756 = vxor.u32 %v1077, 2147483648
    %v1757 = vxor.u32 %v950, 2147483648
    %v1758 = vxor.u32 %v1080, 2147483648
    %v1759 = vxor.u32 %v953, 2147483648
    %v1760 = vxor.u32 %v1083, 2147483648
    %v1761 = vxor.u32 %v956, 2147483648
    %v1762 = vxor.u32 %v1086, 2147483648
    %v1763 = vxor.u32 %v959, 2147483648
    %v1764 = vxor.u32 %v1089, 2147483648
    %v1765 = vxor.u32 %v962, 2147483648
    %v1766 = vxor.u32 %v1092, 2147483648
    %v1767 = vxor.u32 %v965, 2147483648
    %v1768 = vxor.u32 %v1095, 2147483648
    %v1769 = vmul.f32 %v1737, 1.442695
    %v1770 = vpow.pop %v1769
    %v1771 = vmul.f32 %v1738, 1.442695
    %v1772 = vpow.pop %v1771
    %v1773 = vmul.f32 %v1739, 1.442695
    %v1774 = vpow.pop %v1773
    %v1775 = vmul.f32 %v1740, 1.442695
    %v1776 = vpow.pop %v1775
    %v1777 = vmul.f32 %v1741, 1.442695
    %v1778 = vpow.pop %v1777
    %v1779 = vmul.f32 %v1742, 1.442695
    %v1780 = vpow.pop %v1779
    %v1781 = vmul.f32 %v1743, 1.442695
    %v1782 = vpow.pop %v1781
    %v1783 = vmul.f32 %v1744, 1.442695
    %v1784 = vpow.pop %v1783
    %v1785 = vmul.f32 %v1745, 1.442695
    %v1786 = vpow.pop %v1785
    %v1787 = vmul.f32 %v1746, 1.442695
    %v1788 = vpow.pop %v1787
    %v1789 = vmul.f32 %v1747, 1.442695
    %v1790 = vpow.pop %v1789
    %v1791 = vmul.f32 %v1748, 1.442695
    %v1792 = vpow.pop %v1791
    %v1793 = vmul.f32 %v1749, 1.442695
    %v1794 = vpow.pop %v1793
    %v1795 = vmul.f32 %v1750, 1.442695
    %v1796 = vpow.pop %v1795
    %v1797 = vmul.f32 %v1751, 1.442695
    %v1798 = vpow.pop %v1797
    %v1799 = vmul.f32 %v1752, 1.442695
    %v1800 = vpow.pop %v1799
    %v1801 = vmul.f32 %v1753, 1.442695
    %v1802 = vpow.pop %v1801
    %v1803 = vmul.f32 %v1754, 1.442695
    %v1804 = vpow.pop %v1803
    %v1805 = vmul.f32 %v1755, 1.442695
    %v1806 = vpow.pop %v1805
    %v1807 = vmul.f32 %v1756, 1.442695
    %v1808 = vpow.pop %v1807
    %v1809 = vmul.f32 %v1757, 1.442695
    %v1810 = vpow.pop %v1809
    %v1811 = vmul.f32 %v1758, 1.442695
    %v1812 = vpow.pop %v1811
    %v1813 = vmul.f32 %v1759, 1.442695
    %v1814 = vpow.pop %v1813
    %v1815 = vmul.f32 %v1760, 1.442695
    %v1816 = vpow.pop %v1815
    %v1817 = vmul.f32 %v1761, 1.442695
    %v1818 = vpow.pop %v1817
    %v1819 = vmul.f32 %v1762, 1.442695
    %v1820 = vpow.pop %v1819
    %v1821 = vmul.f32 %v1763, 1.442695
    %v1822 = vpow.pop %v1821
    %v1823 = vmul.f32 %v1764, 1.442695
    %v1824 = vpow.pop %v1823
    %v1825 = vmul.f32 %v1765, 1.442695
    %v1826 = vpow.pop %v1825
    %v1827 = vmul.f32 %v1766, 1.442695
    %v1828 = vpow.pop %v1827
    %v1829 = vmul.f32 %v1767, 1.442695
    %v1830 = vpow.pop %v1829
    %v1831 = vmul.f32 %v1768, 1.442695
    %v1832 = vpow.pop %v1831
    %v1833 = vadd.f32 %v1770, 1.0
    %v1834 = vadd.f32 %v1772, 1.0
    %v1835 = vadd.f32 %v1774, 1.0
    %v1836 = vadd.f32 %v1776, 1.0
    %v1837 = vadd.f32 %v1778, 1.0
    %v1838 = vadd.f32 %v1780, 1.0
    %v1839 = vadd.f32 %v1782, 1.0
    %v1840 = vadd.f32 %v1784, 1.0
    %v1841 = vadd.f32 %v1786, 1.0
    %v1842 = vadd.f32 %v1788, 1.0
    %v1843 = vadd.f32 %v1790, 1.0
    %v1844 = vadd.f32 %v1792, 1.0
    %v1845 = vadd.f32 %v1794, 1.0
    %v1846 = vadd.f32 %v1796, 1.0
    %v1847 = vadd.f32 %v1798, 1.0
    %v1848 = vadd.f32 %v1800, 1.0
    %v1849 = vadd.f32 %v1802, 1.0
    %v1850 = vadd.f32 %v1804, 1.0
    %v1851 = vadd.f32 %v1806, 1.0
    %v1852 = vadd.f32 %v1808, 1.0
    %v1853 = vadd.f32 %v1810, 1.0
    %v1854 = vadd.f32 %v1812, 1.0
    %v1855 = vadd.f32 %v1814, 1.0
    %v1856 = vadd.f32 %v1816, 1.0
    %v1857 = vadd.f32 %v1818, 1.0
    %v1858 = vadd.f32 %v1820, 1.0
    %v1859 = vadd.f32 %v1822, 1.0
    %v1860 = vadd.f32 %v1824, 1.0
    %v1861 = vadd.f32 %v1826, 1.0
    %v1862 = vadd.f32 %v1828, 1.0
    %v1863 = vadd.f32 %v1830, 1.0
    %v1864 = vadd.f32 %v1832, 1.0
    %v1865 = vrcp.pop %v1833
    %v1866 = vmul.f32 %v1833, %v1865
    %v1867 = vsub.f32 1.0, %v1866
    %v1868 = vmul.f32 %v1865, %v1867
    %v1869 = vadd.f32 %v1865, %v1868
    %vm1870 = vweird.f32 %v1833
    %vm1871 = vweird.f32 %v1865
    %vm1872 = vmor %vm1870, %vm1871
    %v1873 = vsel %vm1872, %v1865, %v1869
    %v1874 = vand.u32 2147483647, %v1833
    %vm1875 = vcmp.eq.f32.partialorder %v1874, 8.507059e+37
    %v1876 = vand.u32 %v1833, 2147483648
    %v1877 = vor.u32 1.1754944e-38, %v1876
    %v1878 = vsel %vm1875, %v1877, %v1873
    %v1879 = vmul.f32 1.0, %v1878
    %v1880 = vrcp.pop %v1834
    %v1881 = vmul.f32 %v1834, %v1880
    %v1882 = vsub.f32 1.0, %v1881
    %v1883 = vmul.f32 %v1880, %v1882
    %v1884 = vadd.f32 %v1880, %v1883
    %vm1885 = vweird.f32 %v1834
    %vm1886 = vweird.f32 %v1880
    %vm1887 = vmor %vm1885, %vm1886
    %v1888 = vsel %vm1887, %v1880, %v1884
    %v1889 = vand.u32 2147483647, %v1834
    %vm1890 = vcmp.eq.f32.partialorder %v1889, 8.507059e+37
    %v1891 = vand.u32 %v1834, 2147483648
    %v1892 = vor.u32 1.1754944e-38, %v1891
    %v1893 = vsel %vm1890, %v1892, %v1888
    %v1894 = vmul.f32 1.0, %v1893
    %v1895 = vrcp.pop %v1835
    %v1896 = vmul.f32 %v1835, %v1895
    %v1897 = vsub.f32 1.0, %v1896
    %v1898 = vmul.f32 %v1895, %v1897
    %v1899 = vadd.f32 %v1895, %v1898
    %vm1900 = vweird.f32 %v1835
    %vm1901 = vweird.f32 %v1895
    %vm1902 = vmor %vm1900, %vm1901
    %v1903 = vsel %vm1902, %v1895, %v1899
    %v1904 = vand.u32 2147483647, %v1835
    %vm1905 = vcmp.eq.f32.partialorder %v1904, 8.507059e+37
    %v1906 = vand.u32 %v1835, 2147483648
    %v1907 = vor.u32 1.1754944e-38, %v1906
    %v1908 = vsel %vm1905, %v1907, %v1903
    %v1909 = vmul.f32 1.0, %v1908
    %v1910 = vrcp.pop %v1836
    %v1911 = vmul.f32 %v1836, %v1910
    %v1912 = vsub.f32 1.0, %v1911
    %v1913 = vmul.f32 %v1910, %v1912
    %v1914 = vadd.f32 %v1910, %v1913
    %vm1915 = vweird.f32 %v1836
    %vm1916 = vweird.f32 %v1910
    %vm1917 = vmor %vm1915, %vm1916
    %v1918 = vsel %vm1917, %v1910, %v1914
    %v1919 = vand.u32 2147483647, %v1836
    %vm1920 = vcmp.eq.f32.partialorder %v1919, 8.507059e+37
    %v1921 = vand.u32 %v1836, 2147483648
    %v1922 = vor.u32 1.1754944e-38, %v1921
    %v1923 = vsel %vm1920, %v1922, %v1918
    %v1924 = vmul.f32 1.0, %v1923
    %v1925 = vrcp.pop %v1837
    %v1926 = vmul.f32 %v1837, %v1925
    %v1927 = vsub.f32 1.0, %v1926
    %v1928 = vmul.f32 %v1925, %v1927
    %v1929 = vadd.f32 %v1925, %v1928
    %vm1930 = vweird.f32 %v1837
    %vm1931 = vweird.f32 %v1925
    %vm1932 = vmor %vm1930, %vm1931
    %v1933 = vsel %vm1932, %v1925, %v1929
    %v1934 = vand.u32 2147483647, %v1837
    %vm1935 = vcmp.eq.f32.partialorder %v1934, 8.507059e+37
    %v1936 = vand.u32 %v1837, 2147483648
    %v1937 = vor.u32 1.1754944e-38, %v1936
    %v1938 = vsel %vm1935, %v1937, %v1933
    %v1939 = vmul.f32 1.0, %v1938
    %v1940 = vrcp.pop %v1838
    %v1941 = vmul.f32 %v1838, %v1940
    %v1942 = vsub.f32 1.0, %v1941
    %v1943 = vmul.f32 %v1940, %v1942
    %v1944 = vadd.f32 %v1940, %v1943
    %vm1945 = vweird.f32 %v1838
    %vm1946 = vweird.f32 %v1940
    %vm1947 = vmor %vm1945, %vm1946
    %v1948 = vsel %vm1947, %v1940, %v1944
    %v1949 = vand.u32 2147483647, %v1838
    %vm1950 = vcmp.eq.f32.partialorder %v1949, 8.507059e+37
    %v1951 = vand.u32 %v1838, 2147483648
    %v1952 = vor.u32 1.1754944e-38, %v1951
    %v1953 = vsel %vm1950, %v1952, %v1948
    %v1954 = vmul.f32 1.0, %v1953
    %v1955 = vrcp.pop %v1839
    %v1956 = vmul.f32 %v1839, %v1955
    %v1957 = vsub.f32 1.0, %v1956
    %v1958 = vmul.f32 %v1955, %v1957
    %v1959 = vadd.f32 %v1955, %v1958
    %vm1960 = vweird.f32 %v1839
    %vm1961 = vweird.f32 %v1955
    %vm1962 = vmor %vm1960, %vm1961
    %v1963 = vsel %vm1962, %v1955, %v1959
    %v1964 = vand.u32 2147483647, %v1839
    %vm1965 = vcmp.eq.f32.partialorder %v1964, 8.507059e+37
    %v1966 = vand.u32 %v1839, 2147483648
    %v1967 = vor.u32 1.1754944e-38, %v1966
    %v1968 = vsel %vm1965, %v1967, %v1963
    %v1969 = vmul.f32 1.0, %v1968
    %v1970 = vrcp.pop %v1840
    %v1971 = vmul.f32 %v1840, %v1970
    %v1972 = vsub.f32 1.0, %v1971
    %v1973 = vmul.f32 %v1970, %v1972
    %v1974 = vadd.f32 %v1970, %v1973
    %vm1975 = vweird.f32 %v1840
    %vm1976 = vweird.f32 %v1970
    %vm1977 = vmor %vm1975, %vm1976
    %v1978 = vsel %vm1977, %v1970, %v1974
    %v1979 = vand.u32 2147483647, %v1840
    %vm1980 = vcmp.eq.f32.partialorder %v1979, 8.507059e+37
    %v1981 = vand.u32 %v1840, 2147483648
    %v1982 = vor.u32 1.1754944e-38, %v1981
    %v1983 = vsel %vm1980, %v1982, %v1978
    %v1984 = vmul.f32 1.0, %v1983
    %v1985 = vrcp.pop %v1841
    %v1986 = vmul.f32 %v1841, %v1985
    %v1987 = vsub.f32 1.0, %v1986
    %v1988 = vmul.f32 %v1985, %v1987
    %v1989 = vadd.f32 %v1985, %v1988
    %vm1990 = vweird.f32 %v1841
    %vm1991 = vweird.f32 %v1985
    %vm1992 = vmor %vm1990, %vm1991
    %v1993 = vsel %vm1992, %v1985, %v1989
    %v1994 = vand.u32 2147483647, %v1841
    %vm1995 = vcmp.eq.f32.partialorder %v1994, 8.507059e+37
    %v1996 = vand.u32 %v1841, 2147483648
    %v1997 = vor.u32 1.1754944e-38, %v1996
    %v1998 = vsel %vm1995, %v1997, %v1993
    %v1999 = vmul.f32 1.0, %v1998
    %v2000 = vrcp.pop %v1842
    %v2001 = vmul.f32 %v1842, %v2000
    %v2002 = vsub.f32 1.0, %v2001
    %v2003 = vmul.f32 %v2000, %v2002
    %v2004 = vadd.f32 %v2000, %v2003
    %vm2005 = vweird.f32 %v1842
    %vm2006 = vweird.f32 %v2000
    %vm2007 = vmor %vm2005, %vm2006
    %v2008 = vsel %vm2007, %v2000, %v2004
    %v2009 = vand.u32 2147483647, %v1842
    %vm2010 = vcmp.eq.f32.partialorder %v2009, 8.507059e+37
    %v2011 = vand.u32 %v1842, 2147483648
    %v2012 = vor.u32 1.1754944e-38, %v2011
    %v2013 = vsel %vm2010, %v2012, %v2008
    %v2014 = vmul.f32 1.0, %v2013
    %v2015 = vrcp.pop %v1843
    %v2016 = vmul.f32 %v1843, %v2015
    %v2017 = vsub.f32 1.0, %v2016
    %v2018 = vmul.f32 %v2015, %v2017
    %v2019 = vadd.f32 %v2015, %v2018
    %vm2020 = vweird.f32 %v1843
    %vm2021 = vweird.f32 %v2015
    %vm2022 = vmor %vm2020, %vm2021
    %v2023 = vsel %vm2022, %v2015, %v2019
    %v2024 = vand.u32 2147483647, %v1843
    %vm2025 = vcmp.eq.f32.partialorder %v2024, 8.507059e+37
    %v2026 = vand.u32 %v1843, 2147483648
    %v2027 = vor.u32 1.1754944e-38, %v2026
    %v2028 = vsel %vm2025, %v2027, %v2023
    %v2029 = vmul.f32 1.0, %v2028
    %v2030 = vrcp.pop %v1844
    %v2031 = vmul.f32 %v1844, %v2030
    %v2032 = vsub.f32 1.0, %v2031
    %v2033 = vmul.f32 %v2030, %v2032
    %v2034 = vadd.f32 %v2030, %v2033
    %vm2035 = vweird.f32 %v1844
    %vm2036 = vweird.f32 %v2030
    %vm2037 = vmor %vm2035, %vm2036
    %v2038 = vsel %vm2037, %v2030, %v2034
    %v2039 = vand.u32 2147483647, %v1844
    %vm2040 = vcmp.eq.f32.partialorder %v2039, 8.507059e+37
    %v2041 = vand.u32 %v1844, 2147483648
    %v2042 = vor.u32 1.1754944e-38, %v2041
    %v2043 = vsel %vm2040, %v2042, %v2038
    %v2044 = vmul.f32 1.0, %v2043
    %v2045 = vrcp.pop %v1845
    %v2046 = vmul.f32 %v1845, %v2045
    %v2047 = vsub.f32 1.0, %v2046
    %v2048 = vmul.f32 %v2045, %v2047
    %v2049 = vadd.f32 %v2045, %v2048
    %vm2050 = vweird.f32 %v1845
    %vm2051 = vweird.f32 %v2045
    %vm2052 = vmor %vm2050, %vm2051
    %v2053 = vsel %vm2052, %v2045, %v2049
    %v2054 = vand.u32 2147483647, %v1845
    %vm2055 = vcmp.eq.f32.partialorder %v2054, 8.507059e+37
    %v2056 = vand.u32 %v1845, 2147483648
    %v2057 = vor.u32 1.1754944e-38, %v2056
    %v2058 = vsel %vm2055, %v2057, %v2053
    %v2059 = vmul.f32 1.0, %v2058
    %v2060 = vrcp.pop %v1846
    %v2061 = vmul.f32 %v1846, %v2060
    %v2062 = vsub.f32 1.0, %v2061
    %v2063 = vmul.f32 %v2060, %v2062
    %v2064 = vadd.f32 %v2060, %v2063
    %vm2065 = vweird.f32 %v1846
    %vm2066 = vweird.f32 %v2060
    %vm2067 = vmor %vm2065, %vm2066
    %v2068 = vsel %vm2067, %v2060, %v2064
    %v2069 = vand.u32 2147483647, %v1846
    %vm2070 = vcmp.eq.f32.partialorder %v2069, 8.507059e+37
    %v2071 = vand.u32 %v1846, 2147483648
    %v2072 = vor.u32 1.1754944e-38, %v2071
    %v2073 = vsel %vm2070, %v2072, %v2068
    %v2074 = vmul.f32 1.0, %v2073
    %v2075 = vrcp.pop %v1847
    %v2076 = vmul.f32 %v1847, %v2075
    %v2077 = vsub.f32 1.0, %v2076
    %v2078 = vmul.f32 %v2075, %v2077
    %v2079 = vadd.f32 %v2075, %v2078
    %vm2080 = vweird.f32 %v1847
    %vm2081 = vweird.f32 %v2075
    %vm2082 = vmor %vm2080, %vm2081
    %v2083 = vsel %vm2082, %v2075, %v2079
    %v2084 = vand.u32 2147483647, %v1847
    %vm2085 = vcmp.eq.f32.partialorder %v2084, 8.507059e+37
    %v2086 = vand.u32 %v1847, 2147483648
    %v2087 = vor.u32 1.1754944e-38, %v2086
    %v2088 = vsel %vm2085, %v2087, %v2083
    %v2089 = vmul.f32 1.0, %v2088
    %v2090 = vrcp.pop %v1848
    %v2091 = vmul.f32 %v1848, %v2090
    %v2092 = vsub.f32 1.0, %v2091
    %v2093 = vmul.f32 %v2090, %v2092
    %v2094 = vadd.f32 %v2090, %v2093
    %vm2095 = vweird.f32 %v1848
    %vm2096 = vweird.f32 %v2090
    %vm2097 = vmor %vm2095, %vm2096
    %v2098 = vsel %vm2097, %v2090, %v2094
    %v2099 = vand.u32 2147483647, %v1848
    %vm2100 = vcmp.eq.f32.partialorder %v2099, 8.507059e+37
    %v2101 = vand.u32 %v1848, 2147483648
    %v2102 = vor.u32 1.1754944e-38, %v2101
    %v2103 = vsel %vm2100, %v2102, %v2098
    %v2104 = vmul.f32 1.0, %v2103
    %v2105 = vrcp.pop %v1849
    %v2106 = vmul.f32 %v1849, %v2105
    %v2107 = vsub.f32 1.0, %v2106
    %v2108 = vmul.f32 %v2105, %v2107
    %v2109 = vadd.f32 %v2105, %v2108
    %vm2110 = vweird.f32 %v1849
    %vm2111 = vweird.f32 %v2105
    %vm2112 = vmor %vm2110, %vm2111
    %v2113 = vsel %vm2112, %v2105, %v2109
    %v2114 = vand.u32 2147483647, %v1849
    %vm2115 = vcmp.eq.f32.partialorder %v2114, 8.507059e+37
    %v2116 = vand.u32 %v1849, 2147483648
    %v2117 = vor.u32 1.1754944e-38, %v2116
    %v2118 = vsel %vm2115, %v2117, %v2113
    %v2119 = vmul.f32 1.0, %v2118
    %v2120 = vrcp.pop %v1850
    %v2121 = vmul.f32 %v1850, %v2120
    %v2122 = vsub.f32 1.0, %v2121
    %v2123 = vmul.f32 %v2120, %v2122
    %v2124 = vadd.f32 %v2120, %v2123
    %vm2125 = vweird.f32 %v1850
    %vm2126 = vweird.f32 %v2120
    %vm2127 = vmor %vm2125, %vm2126
    %v2128 = vsel %vm2127, %v2120, %v2124
    %v2129 = vand.u32 2147483647, %v1850
    %vm2130 = vcmp.eq.f32.partialorder %v2129, 8.507059e+37
    %v2131 = vand.u32 %v1850, 2147483648
    %v2132 = vor.u32 1.1754944e-38, %v2131
    %v2133 = vsel %vm2130, %v2132, %v2128
    %v2134 = vmul.f32 1.0, %v2133
    %v2135 = vrcp.pop %v1851
    %v2136 = vmul.f32 %v1851, %v2135
    %v2137 = vsub.f32 1.0, %v2136
    %v2138 = vmul.f32 %v2135, %v2137
    %v2139 = vadd.f32 %v2135, %v2138
    %vm2140 = vweird.f32 %v1851
    %vm2141 = vweird.f32 %v2135
    %vm2142 = vmor %vm2140, %vm2141
    %v2143 = vsel %vm2142, %v2135, %v2139
    %v2144 = vand.u32 2147483647, %v1851
    %vm2145 = vcmp.eq.f32.partialorder %v2144, 8.507059e+37
    %v2146 = vand.u32 %v1851, 2147483648
    %v2147 = vor.u32 1.1754944e-38, %v2146
    %v2148 = vsel %vm2145, %v2147, %v2143
    %v2149 = vmul.f32 1.0, %v2148
    %v2150 = vrcp.pop %v1852
    %v2151 = vmul.f32 %v1852, %v2150
    %v2152 = vsub.f32 1.0, %v2151
    %v2153 = vmul.f32 %v2150, %v2152
    %v2154 = vadd.f32 %v2150, %v2153
    %vm2155 = vweird.f32 %v1852
    %vm2156 = vweird.f32 %v2150
    %vm2157 = vmor %vm2155, %vm2156
    %v2158 = vsel %vm2157, %v2150, %v2154
    %v2159 = vand.u32 2147483647, %v1852
    %vm2160 = vcmp.eq.f32.partialorder %v2159, 8.507059e+37
    %v2161 = vand.u32 %v1852, 2147483648
    %v2162 = vor.u32 1.1754944e-38, %v2161
    %v2163 = vsel %vm2160, %v2162, %v2158
    %v2164 = vmul.f32 1.0, %v2163
    %v2165 = vrcp.pop %v1853
    %v2166 = vmul.f32 %v1853, %v2165
    %v2167 = vsub.f32 1.0, %v2166
    %v2168 = vmul.f32 %v2165, %v2167
    %v2169 = vadd.f32 %v2165, %v2168
    %vm2170 = vweird.f32 %v1853
    %vm2171 = vweird.f32 %v2165
    %vm2172 = vmor %vm2170, %vm2171
    %v2173 = vsel %vm2172, %v2165, %v2169
    %v2174 = vand.u32 2147483647, %v1853
    %vm2175 = vcmp.eq.f32.partialorder %v2174, 8.507059e+37
    %v2176 = vand.u32 %v1853, 2147483648
    %v2177 = vor.u32 1.1754944e-38, %v2176
    %v2178 = vsel %vm2175, %v2177, %v2173
    %v2179 = vmul.f32 1.0, %v2178
    %v2180 = vrcp.pop %v1854
    %v2181 = vmul.f32 %v1854, %v2180
    %v2182 = vsub.f32 1.0, %v2181
    %v2183 = vmul.f32 %v2180, %v2182
    %v2184 = vadd.f32 %v2180, %v2183
    %vm2185 = vweird.f32 %v1854
    %vm2186 = vweird.f32 %v2180
    %vm2187 = vmor %vm2185, %vm2186
    %v2188 = vsel %vm2187, %v2180, %v2184
    %v2189 = vand.u32 2147483647, %v1854
    %vm2190 = vcmp.eq.f32.partialorder %v2189, 8.507059e+37
    %v2191 = vand.u32 %v1854, 2147483648
    %v2192 = vor.u32 1.1754944e-38, %v2191
    %v2193 = vsel %vm2190, %v2192, %v2188
    %v2194 = vmul.f32 1.0, %v2193
    %v2195 = vrcp.pop %v1855
    %v2196 = vmul.f32 %v1855, %v2195
    %v2197 = vsub.f32 1.0, %v2196
    %v2198 = vmul.f32 %v2195, %v2197
    %v2199 = vadd.f32 %v2195, %v2198
    %vm2200 = vweird.f32 %v1855
    %vm2201 = vweird.f32 %v2195
    %vm2202 = vmor %vm2200, %vm2201
    %v2203 = vsel %vm2202, %v2195, %v2199
    %v2204 = vand.u32 2147483647, %v1855
    %vm2205 = vcmp.eq.f32.partialorder %v2204, 8.507059e+37
    %v2206 = vand.u32 %v1855, 2147483648
    %v2207 = vor.u32 1.1754944e-38, %v2206
    %v2208 = vsel %vm2205, %v2207, %v2203
    %v2209 = vmul.f32 1.0, %v2208
    %v2210 = vrcp.pop %v1856
    %v2211 = vmul.f32 %v1856, %v2210
    %v2212 = vsub.f32 1.0, %v2211
    %v2213 = vmul.f32 %v2210, %v2212
    %v2214 = vadd.f32 %v2210, %v2213
    %vm2215 = vweird.f32 %v1856
    %vm2216 = vweird.f32 %v2210
    %vm2217 = vmor %vm2215, %vm2216
    %v2218 = vsel %vm2217, %v2210, %v2214
    %v2219 = vand.u32 2147483647, %v1856
    %vm2220 = vcmp.eq.f32.partialorder %v2219, 8.507059e+37
    %v2221 = vand.u32 %v1856, 2147483648
    %v2222 = vor.u32 1.1754944e-38, %v2221
    %v2223 = vsel %vm2220, %v2222, %v2218
    %v2224 = vmul.f32 1.0, %v2223
    %v2225 = vrcp.pop %v1857
    %v2226 = vmul.f32 %v1857, %v2225
    %v2227 = vsub.f32 1.0, %v2226
    %v2228 = vmul.f32 %v2225, %v2227
    %v2229 = vadd.f32 %v2225, %v2228
    %vm2230 = vweird.f32 %v1857
    %vm2231 = vweird.f32 %v2225
    %vm2232 = vmor %vm2230, %vm2231
    %v2233 = vsel %vm2232, %v2225, %v2229
    %v2234 = vand.u32 2147483647, %v1857
    %vm2235 = vcmp.eq.f32.partialorder %v2234, 8.507059e+37
    %v2236 = vand.u32 %v1857, 2147483648
    %v2237 = vor.u32 1.1754944e-38, %v2236
    %v2238 = vsel %vm2235, %v2237, %v2233
    %v2239 = vmul.f32 1.0, %v2238
    %v2240 = vrcp.pop %v1858
    %v2241 = vmul.f32 %v1858, %v2240
    %v2242 = vsub.f32 1.0, %v2241
    %v2243 = vmul.f32 %v2240, %v2242
    %v2244 = vadd.f32 %v2240, %v2243
    %vm2245 = vweird.f32 %v1858
    %vm2246 = vweird.f32 %v2240
    %vm2247 = vmor %vm2245, %vm2246
    %v2248 = vsel %vm2247, %v2240, %v2244
    %v2249 = vand.u32 2147483647, %v1858
    %vm2250 = vcmp.eq.f32.partialorder %v2249, 8.507059e+37
    %v2251 = vand.u32 %v1858, 2147483648
    %v2252 = vor.u32 1.1754944e-38, %v2251
    %v2253 = vsel %vm2250, %v2252, %v2248
    %v2254 = vmul.f32 1.0, %v2253
    %v2255 = vrcp.pop %v1859
    %v2256 = vmul.f32 %v1859, %v2255
    %v2257 = vsub.f32 1.0, %v2256
    %v2258 = vmul.f32 %v2255, %v2257
    %v2259 = vadd.f32 %v2255, %v2258
    %vm2260 = vweird.f32 %v1859
    %vm2261 = vweird.f32 %v2255
    %vm2262 = vmor %vm2260, %vm2261
    %v2263 = vsel %vm2262, %v2255, %v2259
    %v2264 = vand.u32 2147483647, %v1859
    %vm2265 = vcmp.eq.f32.partialorder %v2264, 8.507059e+37
    %v2266 = vand.u32 %v1859, 2147483648
    %v2267 = vor.u32 1.1754944e-38, %v2266
    %v2268 = vsel %vm2265, %v2267, %v2263
    %v2269 = vmul.f32 1.0, %v2268
    %v2270 = vrcp.pop %v1860
    %v2271 = vmul.f32 %v1860, %v2270
    %v2272 = vsub.f32 1.0, %v2271
    %v2273 = vmul.f32 %v2270, %v2272
    %v2274 = vadd.f32 %v2270, %v2273
    %vm2275 = vweird.f32 %v1860
    %vm2276 = vweird.f32 %v2270
    %vm2277 = vmor %vm2275, %vm2276
    %v2278 = vsel %vm2277, %v2270, %v2274
    %v2279 = vand.u32 2147483647, %v1860
    %vm2280 = vcmp.eq.f32.partialorder %v2279, 8.507059e+37
    %v2281 = vand.u32 %v1860, 2147483648
    %v2282 = vor.u32 1.1754944e-38, %v2281
    %v2283 = vsel %vm2280, %v2282, %v2278
    %v2284 = vmul.f32 1.0, %v2283
    %v2285 = vrcp.pop %v1861
    %v2286 = vmul.f32 %v1861, %v2285
    %v2287 = vsub.f32 1.0, %v2286
    %v2288 = vmul.f32 %v2285, %v2287
    %v2289 = vadd.f32 %v2285, %v2288
    %vm2290 = vweird.f32 %v1861
    %vm2291 = vweird.f32 %v2285
    %vm2292 = vmor %vm2290, %vm2291
    %v2293 = vsel %vm2292, %v2285, %v2289
    %v2294 = vand.u32 2147483647, %v1861
    %vm2295 = vcmp.eq.f32.partialorder %v2294, 8.507059e+37
    %v2296 = vand.u32 %v1861, 2147483648
    %v2297 = vor.u32 1.1754944e-38, %v2296
    %v2298 = vsel %vm2295, %v2297, %v2293
    %v2299 = vmul.f32 1.0, %v2298
    %v2300 = vrcp.pop %v1862
    %v2301 = vmul.f32 %v1862, %v2300
    %v2302 = vsub.f32 1.0, %v2301
    %v2303 = vmul.f32 %v2300, %v2302
    %v2304 = vadd.f32 %v2300, %v2303
    %vm2305 = vweird.f32 %v1862
    %vm2306 = vweird.f32 %v2300
    %vm2307 = vmor %vm2305, %vm2306
    %v2308 = vsel %vm2307, %v2300, %v2304
    %v2309 = vand.u32 2147483647, %v1862
    %vm2310 = vcmp.eq.f32.partialorder %v2309, 8.507059e+37
    %v2311 = vand.u32 %v1862, 2147483648
    %v2312 = vor.u32 1.1754944e-38, %v2311
    %v2313 = vsel %vm2310, %v2312, %v2308
    %v2314 = vmul.f32 1.0, %v2313
    %v2315 = vrcp.pop %v1863
    %v2316 = vmul.f32 %v1863, %v2315
    %v2317 = vsub.f32 1.0, %v2316
    %v2318 = vmul.f32 %v2315, %v2317
    %v2319 = vadd.f32 %v2315, %v2318
    %vm2320 = vweird.f32 %v1863
    %vm2321 = vweird.f32 %v2315
    %vm2322 = vmor %vm2320, %vm2321
    %v2323 = vsel %vm2322, %v2315, %v2319
    %v2324 = vand.u32 2147483647, %v1863
    %vm2325 = vcmp.eq.f32.partialorder %v2324, 8.507059e+37
    %v2326 = vand.u32 %v1863, 2147483648
    %v2327 = vor.u32 1.1754944e-38, %v2326
    %v2328 = vsel %vm2325, %v2327, %v2323
    %v2329 = vmul.f32 1.0, %v2328
    %v2330 = vrcp.pop %v1864
    %v2331 = vmul.f32 %v1864, %v2330
    %v2332 = vsub.f32 1.0, %v2331
    %v2333 = vmul.f32 %v2330, %v2332
    %v2334 = vadd.f32 %v2330, %v2333
    %vm2335 = vweird.f32 %v1864
    %vm2336 = vweird.f32 %v2330
    %vm2337 = vmor %vm2335, %vm2336
    %v2338 = vsel %vm2337, %v2330, %v2334
    %v2339 = vand.u32 2147483647, %v1864
    %vm2340 = vcmp.eq.f32.partialorder %v2339, 8.507059e+37
    %v2341 = vand.u32 %v1864, 2147483648
    %v2342 = vor.u32 1.1754944e-38, %v2341
    %v2343 = vsel %vm2340, %v2342, %v2338
    %v2344 = vmul.f32 1.0, %v2343
    %v2345 = vld [vmem:[#allocation5] sm:$0xff]
    %v2346 = vld [vmem:[#allocation5 + $0x8] sm:$0xff]
    %v2347 = vld [vmem:[#allocation5 + $0x10] sm:$0xff]
    %v2348 = vld [vmem:[#allocation5 + $0x18] sm:$0xff]
    %v2349 = vld [vmem:[#allocation5 + $0x20] sm:$0xff]
    %v2350 = vld [vmem:[#allocation5 + $0x28] sm:$0xff]
    %v2351 = vld [vmem:[#allocation5 + $0x30] sm:$0xff]
    %v2352 = vld [vmem:[#allocation5 + $0x38] sm:$0xff]
    %v2353 = vld [vmem:[#allocation5 + $0x40] sm:$0xff]
    %v2354 = vld [vmem:[#allocation5 + $0x48] sm:$0xff]
    %v2355 = vld [vmem:[#allocation5 + $0x50] sm:$0xff]
    %v2356 = vld [vmem:[#allocation5 + $0x58] sm:$0xff]
    %v2357 = vld [vmem:[#allocation5 + $0x60] sm:$0xff]
    %v2358 = vld [vmem:[#allocation5 + $0x68] sm:$0xff]
    %v2359 = vld [vmem:[#allocation5 + $0x70] sm:$0xff]
    %v2360 = vld [vmem:[#allocation5 + $0x78] sm:$0xff]
    %v2361 = vld [vmem:[#allocation5 + $0x80] sm:$0xff]
    %v2362 = vld [vmem:[#allocation5 + $0x88] sm:$0xff]
    %v2363 = vld [vmem:[#allocation5 + $0x90] sm:$0xff]
    %v2364 = vld [vmem:[#allocation5 + $0x98] sm:$0xff]
    %v2365 = vld [vmem:[#allocation5 + $0xa0] sm:$0xff]
    %v2366 = vld [vmem:[#allocation5 + $0xa8] sm:$0xff]
    %v2367 = vld [vmem:[#allocation5 + $0xb0] sm:$0xff]
    %v2368 = vld [vmem:[#allocation5 + $0xb8] sm:$0xff]
    %v2369 = vld [vmem:[#allocation5 + $0xc0] sm:$0xff]
    %v2370 = vld [vmem:[#allocation5 + $0xc8] sm:$0xff]
    %v2371 = vld [vmem:[#allocation5 + $0xd0] sm:$0xff]
    %v2372 = vld [vmem:[#allocation5 + $0xd8] sm:$0xff]
    %v2373 = vld [vmem:[#allocation5 + $0xe0] sm:$0xff]
    %v2374 = vld [vmem:[#allocation5 + $0xe8] sm:$0xff]
    %v2375 = vld [vmem:[#allocation5 + $0xf0] sm:$0xff]
    %v2376 = vld [vmem:[#allocation5 + $0xf8] sm:$0xff]
    %v2377 = vmul.f32 %v2345, %v1879
    %v2378 = vmul.f32 %v2346, %v1894
    %v2379 = vmul.f32 %v2347, %v1909
    %v2380 = vmul.f32 %v2348, %v1924
    %v2381 = vmul.f32 %v2349, %v1939
    %v2382 = vmul.f32 %v2350, %v1954
    %v2383 = vmul.f32 %v2351, %v1969
    %v2384 = vmul.f32 %v2352, %v1984
    %v2385 = vmul.f32 %v2353, %v1999
    %v2386 = vmul.f32 %v2354, %v2014
    %v2387 = vmul.f32 %v2355, %v2029
    %v2388 = vmul.f32 %v2356, %v2044
    %v2389 = vmul.f32 %v2357, %v2059
    %v2390 = vmul.f32 %v2358, %v2074
    %v2391 = vmul.f32 %v2359, %v2089
    %v2392 = vmul.f32 %v2360, %v2104
    %v2393 = vmul.f32 %v2361, %v2119
    %v2394 = vmul.f32 %v2362, %v2134
    %v2395 = vmul.f32 %v2363, %v2149
    %v2396 = vmul.f32 %v2364, %v2164
    %v2397 = vmul.f32 %v2365, %v2179
    %v2398 = vmul.f32 %v2366, %v2194
    %v2399 = vmul.f32 %v2367, %v2209
    %v2400 = vmul.f32 %v2368, %v2224
    %v2401 = vmul.f32 %v2369, %v2239
    %v2402 = vmul.f32 %v2370, %v2254
    %v2403 = vmul.f32 %v2371, %v2269
    %v2404 = vmul.f32 %v2372, %v2284
    %v2405 = vmul.f32 %v2373, %v2299
    %v2406 = vmul.f32 %v2374, %v2314
    %v2407 = vmul.f32 %v2375, %v2329
    %v2408 = vmul.f32 %v2376, %v2344
    %v2409 = vmul.f32 %v1097, %v1271
    %v2410 = vmul.f32 %v1098, %v1286
    %v2411 = vmul.f32 %v1099, %v1301
    %v2412 = vmul.f32 %v1100, %v1316
    %v2413 = vmul.f32 %v1101, %v1331
    %v2414 = vmul.f32 %v1102, %v1346
    %v2415 = vmul.f32 %v1103, %v1361
    %v2416 = vmul.f32 %v1104, %v1376
    %v2417 = vmul.f32 %v1105, %v1391
    %v2418 = vmul.f32 %v1106, %v1406
    %v2419 = vmul.f32 %v1107, %v1421
    %v2420 = vmul.f32 %v1108, %v1436
    %v2421 = vmul.f32 %v1109, %v1451
    %v2422 = vmul.f32 %v1110, %v1466
    %v2423 = vmul.f32 %v1111, %v1481
    %v2424 = vmul.f32 %v1112, %v1496
    %v2425 = vmul.f32 %v1113, %v1511
    %v2426 = vmul.f32 %v1114, %v1526
    %v2427 = vmul.f32 %v1115, %v1541
    %v2428 = vmul.f32 %v1116, %v1556
    %v2429 = vmul.f32 %v1117, %v1571
    %v2430 = vmul.f32 %v1118, %v1586
    %v2431 = vmul.f32 %v1119, %v1601
    %v2432 = vmul.f32 %v1120, %v1616
    %v2433 = vmul.f32 %v1121, %v1631
    %v2434 = vmul.f32 %v1122, %v1646
    %v2435 = vmul.f32 %v1123, %v1661
    %v2436 = vmul.f32 %v1124, %v1676
    %v2437 = vmul.f32 %v1125, %v1691
    %v2438 = vmul.f32 %v1126, %v1706
    %v2439 = vmul.f32 %v1127, %v1721
    %v2440 = vmul.f32 %v1128, %v1736
    %v2441 = vsub.f32 1.0, %v1879
    %v2442 = vsub.f32 1.0, %v1894
    %v2443 = vsub.f32 1.0, %v1909
    %v2444 = vsub.f32 1.0, %v1924
    %v2445 = vsub.f32 1.0, %v1939
    %v2446 = vsub.f32 1.0, %v1954
    %v2447 = vsub.f32 1.0, %v1969
    %v2448 = vsub.f32 1.0, %v1984
    %v2449 = vsub.f32 1.0, %v1999
    %v2450 = vsub.f32 1.0, %v2014
    %v2451 = vsub.f32 1.0, %v2029
    %v2452 = vsub.f32 1.0, %v2044
    %v2453 = vsub.f32 1.0, %v2059
    %v2454 = vsub.f32 1.0, %v2074
    %v2455 = vsub.f32 1.0, %v2089
    %v2456 = vsub.f32 1.0, %v2104
    %v2457 = vsub.f32 1.0, %v2119
    %v2458 = vsub.f32 1.0, %v2134
    %v2459 = vsub.f32 1.0, %v2149
    %v2460 = vsub.f32 1.0, %v2164
    %v2461 = vsub.f32 1.0, %v2179
    %v2462 = vsub.f32 1.0, %v2194
    %v2463 = vsub.f32 1.0, %v2209
    %v2464 = vsub.f32 1.0, %v2224
    %v2465 = vsub.f32 1.0, %v2239
    %v2466 = vsub.f32 1.0, %v2254
    %v2467 = vsub.f32 1.0, %v2269
    %v2468 = vsub.f32 1.0, %v2284
    %v2469 = vsub.f32 1.0, %v2299
    %v2470 = vsub.f32 1.0, %v2314
    %v2471 = vsub.f32 1.0, %v2329
    %v2472 = vsub.f32 1.0, %v2344
    %v2473 = vmul.f32 %v2409, %v2441
    %v2474 = vmul.f32 %v2410, %v2442
    %v2475 = vmul.f32 %v2411, %v2443
    %v2476 = vmul.f32 %v2412, %v2444
    %v2477 = vmul.f32 %v2413, %v2445
    %v2478 = vmul.f32 %v2414, %v2446
    %v2479 = vmul.f32 %v2415, %v2447
    %v2480 = vmul.f32 %v2416, %v2448
    %v2481 = vmul.f32 %v2417, %v2449
    %v2482 = vmul.f32 %v2418, %v2450
    %v2483 = vmul.f32 %v2419, %v2451
    %v2484 = vmul.f32 %v2420, %v2452
    %v2485 = vmul.f32 %v2421, %v2453
    %v2486 = vmul.f32 %v2422, %v2454
    %v2487 = vmul.f32 %v2423, %v2455
    %v2488 = vmul.f32 %v2424, %v2456
    %v2489 = vmul.f32 %v2425, %v2457
    %v2490 = vmul.f32 %v2426, %v2458
    %v2491 = vmul.f32 %v2427, %v2459
    %v2492 = vmul.f32 %v2428, %v2460
    %v2493 = vmul.f32 %v2429, %v2461
    %v2494 = vmul.f32 %v2430, %v2462
    %v2495 = vmul.f32 %v2431, %v2463
    %v2496 = vmul.f32 %v2432, %v2464
    %v2497 = vmul.f32 %v2433, %v2465
    %v2498 = vmul.f32 %v2434, %v2466
    %v2499 = vmul.f32 %v2435, %v2467
    %v2500 = vmul.f32 %v2436, %v2468
    %v2501 = vmul.f32 %v2437, %v2469
    %v2502 = vmul.f32 %v2438, %v2470
    %v2503 = vmul.f32 %v2439, %v2471
    %v2504 = vmul.f32 %v2440, %v2472
    %v2505 = vadd.f32 %v2377, %v2473
    %v2506 = vadd.f32 %v2378, %v2474
    %v2507 = vadd.f32 %v2379, %v2475
    %v2508 = vadd.f32 %v2380, %v2476
    %v2509 = vadd.f32 %v2381, %v2477
    %v2510 = vadd.f32 %v2382, %v2478
    %v2511 = vadd.f32 %v2383, %v2479
    %v2512 = vadd.f32 %v2384, %v2480
    %v2513 = vadd.f32 %v2385, %v2481
    %v2514 = vadd.f32 %v2386, %v2482
    %v2515 = vadd.f32 %v2387, %v2483
    %v2516 = vadd.f32 %v2388, %v2484
    %v2517 = vadd.f32 %v2389, %v2485
    %v2518 = vadd.f32 %v2390, %v2486
    %v2519 = vadd.f32 %v2391, %v2487
    %v2520 = vadd.f32 %v2392, %v2488
    %v2521 = vadd.f32 %v2393, %v2489
    %v2522 = vadd.f32 %v2394, %v2490
    %v2523 = vadd.f32 %v2395, %v2491
    %v2524 = vadd.f32 %v2396, %v2492
    %v2525 = vadd.f32 %v2397, %v2493
    %v2526 = vadd.f32 %v2398, %v2494
    %v2527 = vadd.f32 %v2399, %v2495
    %v2528 = vadd.f32 %v2400, %v2496
    %v2529 = vadd.f32 %v2401, %v2497
    %v2530 = vadd.f32 %v2402, %v2498
    %v2531 = vadd.f32 %v2403, %v2499
    %v2532 = vadd.f32 %v2404, %v2500
    %v2533 = vadd.f32 %v2405, %v2501
    %v2534 = vadd.f32 %v2406, %v2502
    %v2535 = vadd.f32 %v2407, %v2503
    %v2536 = vadd.f32 %v2408, %v2504
    %2537 = vst [vmem:[#allocation10] sm:$0xff] %v2505
    %2538 = vst [vmem:[#allocation10 + $0x8] sm:$0xff] %v2506
    %2539 = vst [vmem:[#allocation10 + $0x10] sm:$0xff] %v2507
    %2540 = vst [vmem:[#allocation10 + $0x18] sm:$0xff] %v2508
    %2541 = vst [vmem:[#allocation10 + $0x20] sm:$0xff] %v2509
    %2542 = vst [vmem:[#allocation10 + $0x28] sm:$0xff] %v2510
    %2543 = vst [vmem:[#allocation10 + $0x30] sm:$0xff] %v2511
    %2544 = vst [vmem:[#allocation10 + $0x38] sm:$0xff] %v2512
    %2545 = vst [vmem:[#allocation10 + $0x40] sm:$0xff] %v2513
    %2546 = vst [vmem:[#allocation10 + $0x48] sm:$0xff] %v2514
    %2547 = vst [vmem:[#allocation10 + $0x50] sm:$0xff] %v2515
    %2548 = vst [vmem:[#allocation10 + $0x58] sm:$0xff] %v2516
    %2549 = vst [vmem:[#allocation10 + $0x60] sm:$0xff] %v2517
    %2550 = vst [vmem:[#allocation10 + $0x68] sm:$0xff] %v2518
    %2551 = vst [vmem:[#allocation10 + $0x70] sm:$0xff] %v2519
    %2552 = vst [vmem:[#allocation10 + $0x78] sm:$0xff] %v2520
    %2553 = vst [vmem:[#allocation10 + $0x80] sm:$0xff] %v2521
    %2554 = vst [vmem:[#allocation10 + $0x88] sm:$0xff] %v2522
    %2555 = vst [vmem:[#allocation10 + $0x90] sm:$0xff] %v2523
    %2556 = vst [vmem:[#allocation10 + $0x98] sm:$0xff] %v2524
    %2557 = vst [vmem:[#allocation10 + $0xa0] sm:$0xff] %v2525
    %2558 = vst [vmem:[#allocation10 + $0xa8] sm:$0xff] %v2526
    %2559 = vst [vmem:[#allocation10 + $0xb0] sm:$0xff] %v2527
    %2560 = vst [vmem:[#allocation10 + $0xb8] sm:$0xff] %v2528
    %2561 = vst [vmem:[#allocation10 + $0xc0] sm:$0xff] %v2529
    %2562 = vst [vmem:[#allocation10 + $0xc8] sm:$0xff] %v2530
    %2563 = vst [vmem:[#allocation10 + $0xd0] sm:$0xff] %v2531
    %2564 = vst [vmem:[#allocation10 + $0xd8] sm:$0xff] %v2532
    %2565 = vst [vmem:[#allocation10 + $0xe0] sm:$0xff] %v2533
    %2566 = vst [vmem:[#allocation10 + $0xe8] sm:$0xff] %v2534
    %2567 = vst [vmem:[#allocation10 + $0xf0] sm:$0xff] %v2535
    %2568 = vst [vmem:[#allocation10 + $0xf8] sm:$0xff] %v2536
    // Predicated region
    $region34: #{tpu_custom_call.1} parent=1 // pred_check
      _
    $region35: #{tpu_custom_call.1} parent=1 // pred_check_branch
      %2570 = sbr.rel (0) target = $region37
    $region36: #{tpu_custom_call.1} parent=1 // pred_region
      %2572 = vsyncadd [#allocation4], 0
      %s2573 = sshll.u32 [#allocation10], 4
      %s2574 = int_to_ptr.vmem [resolvable:$true] %s2573
      %s2575 = sshll.u32 %s4, 4
      %s2576 = int_to_ptr.hbm [resolvable:$true] %s2575
      %2581 = dma.vmem_to_hbm [thread:$0]  %s2574, 4096, %s2576, [#allocation4], 256, 256, 16
    $region37: #{tpu_custom_call.1} parent=1 // pred_fallthru
      _
    // Predicated region
    $region38: #{tpu_custom_call.1} parent=1 // pred_check
      _
    $region39: #{tpu_custom_call.1} parent=1 // pred_check_branch
      %2583 = sbr.rel (0) target = $region41
    $region40: #{tpu_custom_call.1} parent=1 // pred_region
      %2585 = dma.done [#allocation4], 4096
    $region41: #{tpu_custom_call.1} parent=1 // pred_fallthru
      _
    %2586 = vsyncpa [#allocation3], 1
    %2587 = vsyncpa [#allocation6], 1
    %2588 = vsyncpa [#allocation9], 1
    %2589 = vsyncpa [#allocation4], 1

</llo_original>
